<compile_context>
chip_gen: v7x
topology: tpu7x:2x2x1
jax: 0.10.0
libtpu: 0.0.40
codegen_flags: <defaults>
</compile_context>

<pallas_src>
import math
import functools

import numpy as np
import jax
import jax.numpy as jnp
from jax.experimental import pallas as pl
from jax.experimental.pallas import tpu as pltpu


_M_CAP = 256          # target rows per block (matches v6e/v7x 256-wide MXU)
_MIN_TOTAL_STEPS = 4  # >= 2 grid steps per TensorCore on v7x (2 TCs)


# ----------------------------------------------------------------------------
# Fused kernel: QKV projection -> masked full-width attention -> fc_out
# ----------------------------------------------------------------------------

def _st_attention_kernel(xq_ref, xk_ref, xv_ref, w_ref, b_ref, mask_ref, o_ref,
                         *, num_heads, head_dim):
    """One grid step processes M = prod(block[:-1]) rows of E features.

    xq/xk/xv blocks : (..., E) activations (f32, or bf16 on the MXU-byte path)
    w_ref           : (4, E, E)  [Wq.T*scale, Wk.T, Wv.T, Wo.T]   (VMEM-resident)
    b_ref           : (4, 1, E)  [bq*scale, bk, bv, bo], f32      (VMEM-resident)
    mask_ref        : (M, M) f32 additive mask: 0 in-group, -1e30 off-group
    o_ref           : same block shape as the activations, f32
    """
    f32 = jnp.float32
    H, D = num_heads, head_dim
    blk = xq_ref.shape
    E = blk[-1]
    M = 1
    for d in blk[:-1]:
        M *= int(d)
    mm_dt = xq_ref.dtype            # bf16 on the reduced-precision path, else f32

    # Leading-dim-only flatten (cheap; lane dim unchanged).
    xq = xq_ref[...].reshape(M, E)
    xk = xk_ref[...].reshape(M, E)
    xv = xv_ref[...].reshape(M, E)

    # Full-width projections, f32 accumulation.  Softmax scale pre-folded into Wq/bq.
    q_all = jnp.dot(xq, w_ref[0], preferred_element_type=f32) + b_ref[0]
    k_all = jnp.dot(xk, w_ref[1], preferred_element_type=f32) + b_ref[1]
    v_all = jnp.dot(xv, w_ref[2], preferred_element_type=f32) + b_ref[2]

    mask_bias = mask_ref[...]       # (M, M), precomputed on the host

    head_outs = []
    for h in range(H):              # static unroll over heads (H is small)
        lo, hi = h * D, (h + 1) * D
        q_h = q_all[:, lo:hi].astype(mm_dt)
        k_h = k_all[:, lo:hi].astype(mm_dt)
        v_h = v_all[:, lo:hi].astype(mm_dt)

        # (M, M) scores in one MXU pass; grouping enforced by the additive mask,
        # so masked weights are exactly 0 after the max-subtracted exp.
        s = jax.lax.dot_general(q_h, k_h, (((1,), (1,)), ((), ())),
                                preferred_element_type=f32)
        s = s + mask_bias
        m = jnp.max(s, axis=-1, keepdims=True)
        e = jnp.exp(s - m)
        denom = jnp.sum(e, axis=-1, keepdims=True)

        o_h = jnp.dot(e.astype(mm_dt), v_h, preferred_element_type=f32)   # (M, D)

        inv = pl.reciprocal(denom, approx=True)      # EUP slot (off the VALU path)
        inv = inv * (2.0 - denom * inv)              # one Newton step -> ~f32 exact
        head_outs.append(o_h * inv)                  # normalize (M,D), not (M,M)

    o_cat = jnp.concatenate(head_outs, axis=-1)      # (M, E) concat of heads
    out = jnp.dot(o_cat.astype(mm_dt), w_ref[3], preferred_element_type=f32) + b_ref[3]
    o_ref[...] = out.reshape(o_ref.shape).astype(o_ref.dtype)


# ----------------------------------------------------------------------------
# Tiling helpers
# ----------------------------------------------------------------------------

def _pick_groups_per_block(num_groups, rows_per_group, m_cap=_M_CAP,
                           min_total_steps=_MIN_TOTAL_STEPS, other_steps=1):
    """Groups per block: largest divisor of num_groups with TB*rows_per_group <= m_cap,
    shrunk (while keeping blocks reasonably MXU-sized) until the total grid has at
    least `min_total_steps` steps (>= 2 per TensorCore on v7x)."""
    max_tb = max(1, m_cap // max(rows_per_group, 1))
    divisors = [d for d in range(1, num_groups + 1)
                if num_groups % d == 0 and d <= max_tb]
    if not divisors:
        divisors = [1]
    tb = max(divisors)
    total_rows = num_groups * rows_per_group * other_steps
    while (num_groups // tb) * other_steps < min_total_steps:
        floor_rows = min(128, total_rows // min_total_steps)
        smaller = [d for d in divisors if d < tb and d * rows_per_group >= floor_rows]
        if not smaller:
            break
        tb = max(smaller)
    return tb


def _pick_time_chunk(T, N, m_cap=_M_CAP):
    """Time chunk for the spatial path: multiple of 8 (block-shape constraint) or full T."""
    if N * T <= m_cap:
        return T
    cands = [tt for tt in range(8, T, 8) if T % tt == 0]
    fitting = [tt for tt in cands if N * tt <= m_cap]
    if fitting:
        return max(fitting)
    if cands:
        return min(cands)
    return T


# ----------------------------------------------------------------------------
# Wrapper
# ----------------------------------------------------------------------------

def st_attention_forward(value, key, query, params, *, attn_type, num_heads,
                         scale=None, mxu_dtype=jnp.float32):
    """Fused forward of _ST_Attention. value/key/query: (B, N, T, E) float32."""
    B, N, T, E = query.shape
    H = num_heads
    D = E // H
    assert H * D == E
    if scale is None:
        scale = 1.0 / math.sqrt(E)     # module default: 1/sqrt(embed_dim)
    scale = float(scale)
    f32 = jnp.float32

    # Packed resident weights (torch Linear: y = x @ W.T + b); scale folded into Wq/bq.
    w_all = jnp.stack([params["wq"].T * scale, params["wk"].T,
                       params["wv"].T, params["wo"].T]).astype(mxu_dtype)      # (4,E,E)
    b_all = jnp.stack([params["bq"] * scale, params["bk"],
                       params["bv"], params["bo"]]).reshape(4, 1, E).astype(f32)

    q_in, k_in, v_in = query, key, value
    if mxu_dtype != f32:
        # bf16 MXU operands: halves activation DMA bytes; softmax/accumulation stay f32.
        q_in, k_in, v_in = (a.astype(mxu_dtype) for a in (q_in, k_in, v_in))

    if attn_type == "T":
        # Temporal attention: groups (batch, node), attend over time.
        # Contiguous reshape only -- no transposes.
        BG, L = B * N, T
        q_g = q_in.reshape(BG, L, E)
        k_g = k_in.reshape(BG, L, E)
        v_g = v_in.reshape(BG, L, E)
        TB = _pick_groups_per_block(BG, L)
        M = TB * L
        grid = (BG // TB,)
        blk = (TB, L, E)
        act_spec = pl.BlockSpec(blk, lambda i: (i, 0, 0))
        out_spec = pl.BlockSpec(blk, lambda i: (i, 0, 0))

        def res_spec(shape):
            return pl.BlockSpec(shape, lambda i, _n=len(shape): (0,) * _n)

        gid = np.arange(M) // L
        same = gid[:, None] == gid[None, :]
        out_struct = jax.ShapeDtypeStruct((BG, L, E), f32)
        dims_sem = ("parallel",)
        inputs = (q_g, k_g, v_g)

        def post(y):
            return y.reshape(B, N, T, E)

    elif attn_type == "S":
        # Spatial attention: attend over nodes for each (batch, time).
        # No wrapper transposes: the block carries all N nodes for a (batch, time-chunk).
        TT = _pick_time_chunk(T, N)
        TBb = _pick_groups_per_block(B, N * TT, other_steps=T // TT)
        M = TBb * N * TT
        grid = (B // TBb, T // TT)
        blk = (TBb, N, TT, E)
        act_spec = pl.BlockSpec(blk, lambda bi, ti: (bi, 0, ti, 0))
        out_spec = pl.BlockSpec(blk, lambda bi, ti: (bi, 0, ti, 0))

        def res_spec(shape):
            return pl.BlockSpec(shape, lambda bi, ti, _n=len(shape): (0,) * _n)

        r = np.arange(M)                 # rows ordered (b_sub, n, t)
        b_idx = r // (N * TT)
        t_idx = r % TT
        same = (b_idx[:, None] == b_idx[None, :]) & (t_idx[:, None] == t_idx[None, :])
        out_struct = jax.ShapeDtypeStruct((B, N, T, E), f32)
        dims_sem = ("parallel", "parallel")
        inputs = (q_in, k_in, v_in)

        def post(y):
            return y
    else:
        raise ValueError(f"unknown type {attn_type!r}")

    # Additive grouping mask, built once on the host (avoids in-kernel iota/div).
    mask_bias = jnp.asarray(np.where(same, 0.0, -1e30), dtype=f32)

    kern = functools.partial(_st_attention_kernel, num_heads=H, head_dim=D)

    steps = int(np.prod(grid))
    act_bytes = jnp.dtype(mxu_dtype).itemsize
    cost = pl.CostEstimate(
        flops=steps * (8 * M * E * E + 4 * M * M * E),
        transcendentals=steps * H * M * M,
        bytes_accessed=(3 * B * N * T * E * act_bytes + B * N * T * E * 4
                        + 4 * E * E * act_bytes + 4 * E * 4 + M * M * 4),
    )

    out = pl.pallas_call(
        kern,
        out_shape=out_struct,
        grid=grid,
        in_specs=[act_spec, act_spec, act_spec,
                  res_spec((4, E, E)), res_spec((4, 1, E)), res_spec((M, M))],
        out_specs=out_spec,
        compiler_params=pltpu.CompilerParams(
            dimension_semantics=dims_sem,
            vmem_limit_bytes=32 * 1024 * 1024,
        ),
        cost_estimate=cost,
    )(*inputs, w_all, b_all, mask_bias)

    return post(out)


# ----------------------------------------------------------------------------
# Pure-JAX reference (mirrors the PyTorch forward) for verification
# ----------------------------------------------------------------------------

def reference_forward(value, key, query, params, *, attn_type, num_heads, scale=None):
    B, N, T, E = query.shape
    H, D = num_heads, E // num_heads
    if scale is None:
        scale = 1.0 / math.sqrt(E)
    v = (value @ params["wv"].T + params["bv"]).reshape(B, N, T, H, D)
    k = (key @ params["wk"].T + params["bk"]).reshape(B, N, T, H, D)
    q = (query @ params["wq"].T + params["bq"]).reshape(B, N, T, H, D)
    if attn_type == "S":
        s = jnp.einsum("bqthd,bkthd->bqkth", q, k)
        w = jax.nn.softmax(s * scale, axis=2)
        out = jnp.einsum("bqkth,bkthd->bqthd", w, v).reshape(B, N, T, E)
    else:
        s = jnp.einsum("bnqhd,bnkhd->bnqkh", q, k)
        w = jax.nn.softmax(s * scale, axis=3)
        out = jnp.einsum("bnqkh,bnkhd->bnqhd", w, v).reshape(B, N, T, E)
    out = jnp.where(jnp.isnan(out), 0.0, out)
    return out @ params["wo"].T + params["bo"]


# ----------------------------------------------------------------------------
# Main
# ----------------------------------------------------------------------------

if __name__ == "__main__":
    B, N, T, E, H = 2, 4, 8, 32, 4   # batch, nodes, time, embed_dim, heads

    root = jax.random.PRNGKey(0)
    ks = jax.random.split(root, 11)

    value = jax.random.normal(ks[0], (B, N, T, E), jnp.float32)
    key_in = jax.random.normal(ks[1], (B, N, T, E), jnp.float32)
    query = jax.random.normal(ks[2], (B, N, T, E), jnp.float32)

    def init_w(k):
        return jax.random.normal(k, (E, E), jnp.float32) * (1.0 / math.sqrt(E))

    def init_b(k):
        return jax.random.normal(k, (E,), jnp.float32) * 0.02

    params = dict(
        wv=init_w(ks[3]), bv=init_b(ks[4]),
        wk=init_w(ks[5]), bk=init_b(ks[6]),
        wq=init_w(ks[7]), bq=init_b(ks[8]),
        wo=init_w(ks[9]), bo=init_b(ks[10]),
    )

    ok = True
    for attn_type in ("T", "S"):
        ref = reference_forward(value, key_in, query, params,
                                attn_type=attn_type, num_heads=H)

        # f32 path (tight tolerance).
        out = st_attention_forward(value, key_in, query, params,
                                   attn_type=attn_type, num_heads=H)
        out = jax.block_until_ready(out)
        if not bool(jnp.allclose(out, ref, atol=1e-3, rtol=1e-3)):
            ok = False
            print(f"MISMATCH (f32 path) type={attn_type}, "
                  f"max abs err = {float(jnp.max(jnp.abs(out - ref)))}")

        # bf16 MXU-operand path (byte-reduction optimization); loose tolerance.
        out_bf16 = st_attention_forward(value, key_in, query, params,
                                        attn_type=attn_type, num_heads=H,
                                        mxu_dtype=jnp.bfloat16)
        out_bf16 = jax.block_until_ready(out_bf16)
        if not bool(jnp.allclose(out_bf16, ref, atol=1e-1, rtol=1e-1)):
            ok = False
            print(f"MISMATCH (bf16 MXU path) type={attn_type}, "
                  f"max abs err = {float(jnp.max(jnp.abs(out_bf16 - ref)))}")

    if ok:
        print("KERNEL_OK")
</pallas_src>

<mosaic_0001>
module attributes {stable_mosaic.version = 11 : i64} {
  func.func @_st_attention_kernel(%arg0: i32, %arg1: memref<2x8x32xf32, #tpu.memory_space<vmem>>, %arg2: memref<2x8x32xf32, #tpu.memory_space<vmem>>, %arg3: memref<2x8x32xf32, #tpu.memory_space<vmem>>, %arg4: memref<4x32x32xf32, #tpu.memory_space<vmem>>, %arg5: memref<4x1x32xf32, #tpu.memory_space<vmem>>, %arg6: memref<16x16xf32, #tpu.memory_space<vmem>>, %arg7: memref<2x8x32xf32, #tpu.memory_space<vmem>>) attributes {dimension_semantics = [#tpu.dimension_semantics<parallel>], iteration_bounds = array<i64: 4>, scalar_prefetch = 0 : i64, scratch_operands = 0 : i64, tpu.core_type = #tpu.core_type<tc>, window_params = [{transform_indices = @transform_0, window_bounds = array<i64: 2, 8, 32>}, {transform_indices = @transform_1, window_bounds = array<i64: 2, 8, 32>}, {transform_indices = @transform_2, window_bounds = array<i64: 2, 8, 32>}, {pipeline_mode = #tpu.pipeline_mode<synchronous>, transform_indices = @transform_3, window_bounds = array<i64: 4, 32, 32>}, {pipeline_mode = #tpu.pipeline_mode<synchronous>, transform_indices = @transform_4, window_bounds = array<i64: 4, 1, 32>}, {pipeline_mode = #tpu.pipeline_mode<synchronous>, transform_indices = @transform_5, window_bounds = array<i64: 16, 16>}, {transform_indices = @transform_6, window_bounds = array<i64: 2, 8, 32>}]} {
    %c0 = arith.constant 0 : index
    %c0_0 = arith.constant 0 : index
    %c0_1 = arith.constant 0 : index
    %0 = vector.load %arg1[%c0, %c0_0, %c0_1] : memref<2x8x32xf32, #tpu.memory_space<vmem>>, vector<2x8x32xf32>
    %1 = vector.shape_cast %0 : vector<2x8x32xf32> to vector<16x32xf32>
    %c0_2 = arith.constant 0 : index
    %c0_3 = arith.constant 0 : index
    %c0_4 = arith.constant 0 : index
    %2 = vector.load %arg2[%c0_2, %c0_3, %c0_4] : memref<2x8x32xf32, #tpu.memory_space<vmem>>, vector<2x8x32xf32>
    %3 = vector.shape_cast %2 : vector<2x8x32xf32> to vector<16x32xf32>
    %c0_5 = arith.constant 0 : index
    %c0_6 = arith.constant 0 : index
    %c0_7 = arith.constant 0 : index
    %4 = vector.load %arg3[%c0_5, %c0_6, %c0_7] : memref<2x8x32xf32, #tpu.memory_space<vmem>>, vector<2x8x32xf32>
    %5 = vector.shape_cast %4 : vector<2x8x32xf32> to vector<16x32xf32>
    %c0_8 = arith.constant 0 : index
    %c0_9 = arith.constant 0 : index
    %c0_10 = arith.constant 0 : index
    %6 = vector.load %arg4[%c0_8, %c0_9, %c0_10] : memref<4x32x32xf32, #tpu.memory_space<vmem>>, vector<1x32x32xf32>
    %7 = vector.shape_cast %6 : vector<1x32x32xf32> to vector<32x32xf32>
    %cst = arith.constant dense<0.000000e+00> : vector<16x32xf32>
    %8 = tpu.matmul %1, %7, %cst {dimension_numbers = #tpu.dot_dimension_numbers<[1], [0], [0], [1], [0, 0, 1, 1], [], []>} : vector<16x32xf32>, vector<32x32xf32>, vector<16x32xf32> -> vector<16x32xf32>
    %c0_11 = arith.constant 0 : index
    %c0_12 = arith.constant 0 : index
    %c0_13 = arith.constant 0 : index
    %9 = vector.load %arg5[%c0_11, %c0_12, %c0_13] : memref<4x1x32xf32, #tpu.memory_space<vmem>>, vector<1x1x32xf32>
    %10 = vector.shape_cast %9 : vector<1x1x32xf32> to vector<1x32xf32>
    %11 = vector.broadcast %10 : vector<1x32xf32> to vector<16x32xf32>
    %12 = arith.addf %8, %11 : vector<16x32xf32>
    %c1 = arith.constant 1 : index
    %c0_14 = arith.constant 0 : index
    %c0_15 = arith.constant 0 : index
    %13 = vector.load %arg4[%c1, %c0_14, %c0_15] : memref<4x32x32xf32, #tpu.memory_space<vmem>>, vector<1x32x32xf32>
    %14 = vector.shape_cast %13 : vector<1x32x32xf32> to vector<32x32xf32>
    %cst_16 = arith.constant dense<0.000000e+00> : vector<16x32xf32>
    %15 = tpu.matmul %3, %14, %cst_16 {dimension_numbers = #tpu.dot_dimension_numbers<[1], [0], [0], [1], [0, 0, 1, 1], [], []>} : vector<16x32xf32>, vector<32x32xf32>, vector<16x32xf32> -> vector<16x32xf32>
    %c1_17 = arith.constant 1 : index
    %c0_18 = arith.constant 0 : index
    %c0_19 = arith.constant 0 : index
    %16 = vector.load %arg5[%c1_17, %c0_18, %c0_19] : memref<4x1x32xf32, #tpu.memory_space<vmem>>, vector<1x1x32xf32>
    %17 = vector.shape_cast %16 : vector<1x1x32xf32> to vector<1x32xf32>
    %18 = vector.broadcast %17 : vector<1x32xf32> to vector<16x32xf32>
    %19 = arith.addf %15, %18 : vector<16x32xf32>
    %c2 = arith.constant 2 : index
    %c0_20 = arith.constant 0 : index
    %c0_21 = arith.constant 0 : index
    %20 = vector.load %arg4[%c2, %c0_20, %c0_21] : memref<4x32x32xf32, #tpu.memory_space<vmem>>, vector<1x32x32xf32>
    %21 = vector.shape_cast %20 : vector<1x32x32xf32> to vector<32x32xf32>
    %cst_22 = arith.constant dense<0.000000e+00> : vector<16x32xf32>
    %22 = tpu.matmul %5, %21, %cst_22 {dimension_numbers = #tpu.dot_dimension_numbers<[1], [0], [0], [1], [0, 0, 1, 1], [], []>} : vector<16x32xf32>, vector<32x32xf32>, vector<16x32xf32> -> vector<16x32xf32>
    %c2_23 = arith.constant 2 : index
    %c0_24 = arith.constant 0 : index
    %c0_25 = arith.constant 0 : index
    %23 = vector.load %arg5[%c2_23, %c0_24, %c0_25] : memref<4x1x32xf32, #tpu.memory_space<vmem>>, vector<1x1x32xf32>
    %24 = vector.shape_cast %23 : vector<1x1x32xf32> to vector<1x32xf32>
    %25 = vector.broadcast %24 : vector<1x32xf32> to vector<16x32xf32>
    %26 = arith.addf %22, %25 : vector<16x32xf32>
    %c0_26 = arith.constant 0 : index
    %c0_27 = arith.constant 0 : index
    %27 = vector.load %arg6[%c0_26, %c0_27] : memref<16x16xf32, #tpu.memory_space<vmem>>, vector<16x16xf32>
    %28 = vector.extract_strided_slice %12 {offsets = [0, 0], sizes = [16, 8], strides = [1, 1]} : vector<16x32xf32> to vector<16x8xf32>
    %29 = vector.extract_strided_slice %19 {offsets = [0, 0], sizes = [16, 8], strides = [1, 1]} : vector<16x32xf32> to vector<16x8xf32>
    %30 = vector.extract_strided_slice %26 {offsets = [0, 0], sizes = [16, 8], strides = [1, 1]} : vector<16x32xf32> to vector<16x8xf32>
    %cst_28 = arith.constant dense<0.000000e+00> : vector<16x16xf32>
    %31 = tpu.matmul %28, %29, %cst_28 {dimension_numbers = #tpu.dot_dimension_numbers<[1], [1], [0], [0], [0, 0, 1, 0], [], []>} : vector<16x8xf32>, vector<16x8xf32>, vector<16x16xf32> -> vector<16x16xf32>
    %32 = arith.addf %31, %27 : vector<16x16xf32>
    %cst_29 = arith.constant dense<0xFF800000> : vector<16xf32>
    %33 = vector.multi_reduction <maximumf>, %32, %cst_29 [1] : vector<16x16xf32> to vector<16xf32>
    %34 = vector.shape_cast %33 : vector<16xf32> to vector<16x1xf32>
    %35 = vector.broadcast %34 : vector<16x1xf32> to vector<16x16xf32>
    %36 = arith.subf %32, %35 : vector<16x16xf32>
    %37 = math.exp %36 : vector<16x16xf32>
    %cst_30 = arith.constant dense<0.000000e+00> : vector<16xf32>
    %38 = vector.multi_reduction <add>, %37, %cst_30 [1] : vector<16x16xf32> to vector<16xf32>
    %39 = vector.shape_cast %38 : vector<16xf32> to vector<16x1xf32>
    %cst_31 = arith.constant dense<0.000000e+00> : vector<16x8xf32>
    %40 = tpu.matmul %37, %30, %cst_31 {dimension_numbers = #tpu.dot_dimension_numbers<[1], [0], [0], [1], [0, 0, 1, 1], [], []>} : vector<16x16xf32>, vector<16x8xf32>, vector<16x8xf32> -> vector<16x8xf32>
    %41 = tpu.reciprocal %39 {approx = true} : vector<16x1xf32> -> vector<16x1xf32>
    %42 = arith.mulf %39, %41 : vector<16x1xf32>
    %cst_32 = arith.constant 2.000000e+00 : f32
    %43 = vector.broadcast %cst_32 : f32 to vector<16x1xf32>
    %44 = arith.subf %43, %42 : vector<16x1xf32>
    %45 = arith.mulf %41, %44 : vector<16x1xf32>
    %46 = vector.broadcast %45 : vector<16x1xf32> to vector<16x8xf32>
    %47 = arith.mulf %40, %46 : vector<16x8xf32>
    %48 = vector.extract_strided_slice %12 {offsets = [0, 8], sizes = [16, 8], strides = [1, 1]} : vector<16x32xf32> to vector<16x8xf32>
    %49 = vector.extract_strided_slice %19 {offsets = [0, 8], sizes = [16, 8], strides = [1, 1]} : vector<16x32xf32> to vector<16x8xf32>
    %50 = vector.extract_strided_slice %26 {offsets = [0, 8], sizes = [16, 8], strides = [1, 1]} : vector<16x32xf32> to vector<16x8xf32>
    %cst_33 = arith.constant dense<0.000000e+00> : vector<16x16xf32>
    %51 = tpu.matmul %48, %49, %cst_33 {dimension_numbers = #tpu.dot_dimension_numbers<[1], [1], [0], [0], [0, 0, 1, 0], [], []>} : vector<16x8xf32>, vector<16x8xf32>, vector<16x16xf32> -> vector<16x16xf32>
    %52 = arith.addf %51, %27 : vector<16x16xf32>
    %cst_34 = arith.constant dense<0xFF800000> : vector<16xf32>
    %53 = vector.multi_reduction <maximumf>, %52, %cst_34 [1] : vector<16x16xf32> to vector<16xf32>
    %54 = vector.shape_cast %53 : vector<16xf32> to vector<16x1xf32>
    %55 = vector.broadcast %54 : vector<16x1xf32> to vector<16x16xf32>
    %56 = arith.subf %52, %55 : vector<16x16xf32>
    %57 = math.exp %56 : vector<16x16xf32>
    %cst_35 = arith.constant dense<0.000000e+00> : vector<16xf32>
    %58 = vector.multi_reduction <add>, %57, %cst_35 [1] : vector<16x16xf32> to vector<16xf32>
    %59 = vector.shape_cast %58 : vector<16xf32> to vector<16x1xf32>
    %cst_36 = arith.constant dense<0.000000e+00> : vector<16x8xf32>
    %60 = tpu.matmul %57, %50, %cst_36 {dimension_numbers = #tpu.dot_dimension_numbers<[1], [0], [0], [1], [0, 0, 1, 1], [], []>} : vector<16x16xf32>, vector<16x8xf32>, vector<16x8xf32> -> vector<16x8xf32>
    %61 = tpu.reciprocal %59 {approx = true} : vector<16x1xf32> -> vector<16x1xf32>
    %62 = arith.mulf %59, %61 : vector<16x1xf32>
    %cst_37 = arith.constant 2.000000e+00 : f32
    %63 = vector.broadcast %cst_37 : f32 to vector<16x1xf32>
    %64 = arith.subf %63, %62 : vector<16x1xf32>
    %65 = arith.mulf %61, %64 : vector<16x1xf32>
    %66 = vector.broadcast %65 : vector<16x1xf32> to vector<16x8xf32>
    %67 = arith.mulf %60, %66 : vector<16x8xf32>
    %68 = vector.extract_strided_slice %12 {offsets = [0, 16], sizes = [16, 8], strides = [1, 1]} : vector<16x32xf32> to vector<16x8xf32>
    %69 = vector.extract_strided_slice %19 {offsets = [0, 16], sizes = [16, 8], strides = [1, 1]} : vector<16x32xf32> to vector<16x8xf32>
    %70 = vector.extract_strided_slice %26 {offsets = [0, 16], sizes = [16, 8], strides = [1, 1]} : vector<16x32xf32> to vector<16x8xf32>
    %cst_38 = arith.constant dense<0.000000e+00> : vector<16x16xf32>
    %71 = tpu.matmul %68, %69, %cst_38 {dimension_numbers = #tpu.dot_dimension_numbers<[1], [1], [0], [0], [0, 0, 1, 0], [], []>} : vector<16x8xf32>, vector<16x8xf32>, vector<16x16xf32> -> vector<16x16xf32>
    %72 = arith.addf %71, %27 : vector<16x16xf32>
    %cst_39 = arith.constant dense<0xFF800000> : vector<16xf32>
    %73 = vector.multi_reduction <maximumf>, %72, %cst_39 [1] : vector<16x16xf32> to vector<16xf32>
    %74 = vector.shape_cast %73 : vector<16xf32> to vector<16x1xf32>
    %75 = vector.broadcast %74 : vector<16x1xf32> to vector<16x16xf32>
    %76 = arith.subf %72, %75 : vector<16x16xf32>
    %77 = math.exp %76 : vector<16x16xf32>
    %cst_40 = arith.constant dense<0.000000e+00> : vector<16xf32>
    %78 = vector.multi_reduction <add>, %77, %cst_40 [1] : vector<16x16xf32> to vector<16xf32>
    %79 = vector.shape_cast %78 : vector<16xf32> to vector<16x1xf32>
    %cst_41 = arith.constant dense<0.000000e+00> : vector<16x8xf32>
    %80 = tpu.matmul %77, %70, %cst_41 {dimension_numbers = #tpu.dot_dimension_numbers<[1], [0], [0], [1], [0, 0, 1, 1], [], []>} : vector<16x16xf32>, vector<16x8xf32>, vector<16x8xf32> -> vector<16x8xf32>
    %81 = tpu.reciprocal %79 {approx = true} : vector<16x1xf32> -> vector<16x1xf32>
    %82 = arith.mulf %79, %81 : vector<16x1xf32>
    %cst_42 = arith.constant 2.000000e+00 : f32
    %83 = vector.broadcast %cst_42 : f32 to vector<16x1xf32>
    %84 = arith.subf %83, %82 : vector<16x1xf32>
    %85 = arith.mulf %81, %84 : vector<16x1xf32>
    %86 = vector.broadcast %85 : vector<16x1xf32> to vector<16x8xf32>
    %87 = arith.mulf %80, %86 : vector<16x8xf32>
    %88 = vector.extract_strided_slice %12 {offsets = [0, 24], sizes = [16, 8], strides = [1, 1]} : vector<16x32xf32> to vector<16x8xf32>
    %89 = vector.extract_strided_slice %19 {offsets = [0, 24], sizes = [16, 8], strides = [1, 1]} : vector<16x32xf32> to vector<16x8xf32>
    %90 = vector.extract_strided_slice %26 {offsets = [0, 24], sizes = [16, 8], strides = [1, 1]} : vector<16x32xf32> to vector<16x8xf32>
    %cst_43 = arith.constant dense<0.000000e+00> : vector<16x16xf32>
    %91 = tpu.matmul %88, %89, %cst_43 {dimension_numbers = #tpu.dot_dimension_numbers<[1], [1], [0], [0], [0, 0, 1, 0], [], []>} : vector<16x8xf32>, vector<16x8xf32>, vector<16x16xf32> -> vector<16x16xf32>
    %92 = arith.addf %91, %27 : vector<16x16xf32>
    %cst_44 = arith.constant dense<0xFF800000> : vector<16xf32>
    %93 = vector.multi_reduction <maximumf>, %92, %cst_44 [1] : vector<16x16xf32> to vector<16xf32>
    %94 = vector.shape_cast %93 : vector<16xf32> to vector<16x1xf32>
    %95 = vector.broadcast %94 : vector<16x1xf32> to vector<16x16xf32>
    %96 = arith.subf %92, %95 : vector<16x16xf32>
    %97 = math.exp %96 : vector<16x16xf32>
    %cst_45 = arith.constant dense<0.000000e+00> : vector<16xf32>
    %98 = vector.multi_reduction <add>, %97, %cst_45 [1] : vector<16x16xf32> to vector<16xf32>
    %99 = vector.shape_cast %98 : vector<16xf32> to vector<16x1xf32>
    %cst_46 = arith.constant dense<0.000000e+00> : vector<16x8xf32>
    %100 = tpu.matmul %97, %90, %cst_46 {dimension_numbers = #tpu.dot_dimension_numbers<[1], [0], [0], [1], [0, 0, 1, 1], [], []>} : vector<16x16xf32>, vector<16x8xf32>, vector<16x8xf32> -> vector<16x8xf32>
    %101 = tpu.reciprocal %99 {approx = true} : vector<16x1xf32> -> vector<16x1xf32>
    %102 = arith.mulf %99, %101 : vector<16x1xf32>
    %cst_47 = arith.constant 2.000000e+00 : f32
    %103 = vector.broadcast %cst_47 : f32 to vector<16x1xf32>
    %104 = arith.subf %103, %102 : vector<16x1xf32>
    %105 = arith.mulf %101, %104 : vector<16x1xf32>
    %106 = vector.broadcast %105 : vector<16x1xf32> to vector<16x8xf32>
    %107 = arith.mulf %100, %106 : vector<16x8xf32>
    %108 = tpu.concatenate %47, %67, %87, %107 in 1 : vector<16x8xf32>, vector<16x8xf32>, vector<16x8xf32>, vector<16x8xf32> -> vector<16x32xf32>
    %c3 = arith.constant 3 : index
    %c0_48 = arith.constant 0 : index
    %c0_49 = arith.constant 0 : index
    %109 = vector.load %arg4[%c3, %c0_48, %c0_49] : memref<4x32x32xf32, #tpu.memory_space<vmem>>, vector<1x32x32xf32>
    %110 = vector.shape_cast %109 : vector<1x32x32xf32> to vector<32x32xf32>
    %cst_50 = arith.constant dense<0.000000e+00> : vector<16x32xf32>
    %111 = tpu.matmul %108, %110, %cst_50 {dimension_numbers = #tpu.dot_dimension_numbers<[1], [0], [0], [1], [0, 0, 1, 1], [], []>} : vector<16x32xf32>, vector<32x32xf32>, vector<16x32xf32> -> vector<16x32xf32>
    %c3_51 = arith.constant 3 : index
    %c0_52 = arith.constant 0 : index
    %c0_53 = arith.constant 0 : index
    %112 = vector.load %arg5[%c3_51, %c0_52, %c0_53] : memref<4x1x32xf32, #tpu.memory_space<vmem>>, vector<1x1x32xf32>
    %113 = vector.shape_cast %112 : vector<1x1x32xf32> to vector<1x32xf32>
    %114 = vector.broadcast %113 : vector<1x32xf32> to vector<16x32xf32>
    %115 = arith.addf %111, %114 : vector<16x32xf32>
    %116 = vector.shape_cast %115 : vector<16x32xf32> to vector<2x8x32xf32>
    %c0_54 = arith.constant 0 : index
    %c0_55 = arith.constant 0 : index
    %c0_56 = arith.constant 0 : index
    %117 = vector.load %arg7[%c0_54, %c0_55, %c0_56] : memref<2x8x32xf32, #tpu.memory_space<vmem>>, vector<2x8x32xf32>
    tpu.vector_store %arg7[%c0_54, %c0_55, %c0_56], %116 {strides = array<i32>} : memref<2x8x32xf32, #tpu.memory_space<vmem>>, vector<2x8x32xf32>,
    return
  }
  func.func @transform_0(%arg0: i32) -> (i32, i32, i32) {
    %c0_i32 = arith.constant 0 : i32
    %c0_i32_0 = arith.constant 0 : i32
    %c0_i32_1 = arith.constant 0 : i32
    return %arg0, %c0_i32, %c0_i32_0 : i32, i32, i32
  }
  func.func @transform_1(%arg0: i32) -> (i32, i32, i32) {
    %c0_i32 = arith.constant 0 : i32
    %c0_i32_0 = arith.constant 0 : i32
    %c0_i32_1 = arith.constant 0 : i32
    return %arg0, %c0_i32, %c0_i32_0 : i32, i32, i32
  }
  func.func @transform_2(%arg0: i32) -> (i32, i32, i32) {
    %c0_i32 = arith.constant 0 : i32
    %c0_i32_0 = arith.constant 0 : i32
    %c0_i32_1 = arith.constant 0 : i32
    return %arg0, %c0_i32, %c0_i32_0 : i32, i32, i32
  }
  func.func @transform_3(%arg0: i32) -> (i32, i32, i32) {
    %c0_i32 = arith.constant 0 : i32
    %c0_i32_0 = arith.constant 0 : i32
    %c0_i32_1 = arith.constant 0 : i32
    %c0_i32_2 = arith.constant 0 : i32
    return %c0_i32, %c0_i32_0, %c0_i32_1 : i32, i32, i32
  }
  func.func @transform_4(%arg0: i32) -> (i32, i32, i32) {
    %c0_i32 = arith.constant 0 : i32
    %c0_i32_0 = arith.constant 0 : i32
    %c0_i32_1 = arith.constant 0 : i32
    %c0_i32_2 = arith.constant 0 : i32
    return %c0_i32, %c0_i32_0, %c0_i32_1 : i32, i32, i32
  }
  func.func @transform_5(%arg0: i32) -> (i32, i32) {
    %c0_i32 = arith.constant 0 : i32
    %c0_i32_0 = arith.constant 0 : i32
    %c0_i32_1 = arith.constant 0 : i32
    return %c0_i32, %c0_i32_0 : i32, i32
  }
  func.func @transform_6(%arg0: i32) -> (i32, i32, i32) {
    %c0_i32 = arith.constant 0 : i32
    %c0_i32_0 = arith.constant 0 : i32
    %c0_i32_1 = arith.constant 0 : i32
    return %arg0, %c0_i32, %c0_i32_0 : i32, i32, i32
  }
}

</mosaic_0001>

<llo_original>
// kernel: tpu_custom_call.1
$region0: #{tpu_custom_call.1}
  #allocation0 [shape = 'u32[]', space=smem, size = 0x4, offset = 0x4, fixed_abs, tag = 'smem constant byte address 0x4 - core index']
  #allocation1 [shape = 'u32[144,128]{1,0:T(1,128)}', space=vmem, size = 0x12000, scoped, tag = 'internal scratch']
  %s0 = inlined_call_operand.hbm [shape: f32[8,8,32], index: 0, kind: input, shape index: {}]
  %s1 = inlined_call_operand.hbm [shape: f32[8,8,32], index: 1, kind: input, shape index: {}]
  %s2 = inlined_call_operand.hbm [shape: f32[8,8,32], index: 2, kind: input, shape index: {}]
  %s3 = inlined_call_operand.hbm [shape: f32[4,32,32], index: 3, kind: input, shape index: {}]
  %s4 = inlined_call_operand.hbm [shape: f32[4,1,32], index: 4, kind: input, shape index: {}]
  %s5 = inlined_call_operand.vmem [shape: f32[16,16], index: 5, kind: input, shape index: {}]
  %s6 = inlined_call_operand.hbm [shape: f32[8,8,32], index: 6, kind: output, shape index: {}]
  %s7 = sld [smem:[#allocation0]]
  $region77: #{tpu_custom_call.1} parent=0
    _
  %s9 = ssub.s32 1, %s7
  %s10 = scalar_select 0, %s9, %s7
  $region1: #{tpu_custom_call.1} parent=0
    #allocation2 [shape = 'u8[16384]{0}', space=vmem, size = 0x4000, scoped, tag = 'input window, operand 0']
    #allocation3 [shape = 's32[2]{0}', space=sflag, size = 0x8, scoped, tag = 'scoped memory for tpu_custom_call.1']
    #allocation4 [shape = 's32[2]{0}', space=sflag, size = 0x8, scoped, tag = 'scoped memory for tpu_custom_call.1']
    #allocation5 [shape = 'u8[16384]{0}', space=vmem, size = 0x4000, scoped, tag = 'input window, operand 1']
    #allocation6 [shape = 's32[2]{0}', space=sflag, size = 0x8, scoped, tag = 'scoped memory for tpu_custom_call.1']
    #allocation7 [shape = 'u8[16384]{0}', space=vmem, size = 0x4000, scoped, tag = 'input window, operand 2']
    #allocation8 [shape = 'u8[65536]{0}', space=vmem, size = 0x10000, scoped, tag = 'input window, operand 3, single buffered']
    #allocation9 [shape = 's32[1]{0}', space=sflag, size = 0x4, scoped, tag = 'scoped memory for tpu_custom_call.1']
    #allocation10 [shape = 'u8[2048]{0}', space=vmem, size = 0x800, scoped, tag = 'input window, operand 4, single buffered']
    #allocation11 [shape = 'u8[16384]{0}', space=vmem, size = 0x4000, scoped, tag = 'output window, operand 0']
    %11 = vsyncpa [#allocation3], 0
    %s12 = scalar_lea.sflag [#allocation3], 1
    %13 = vsyncpa %s12, 0
    %14 = vsyncpa [#allocation6], 0
    %s15 = scalar_lea.sflag [#allocation6], 1
    %16 = vsyncpa %s15, 0
    %17 = vsyncpa [#allocation9], 0
    %18 = vsyncpa [#allocation4], 0
    %s19 = scalar_lea.sflag [#allocation4], 1
    %20 = vsyncpa %s19, 0
    loop: start=0, step=1, limit=6
    $region2: #{tpu_custom_call.1} parent=1 // loop_pre_header
      _
    $region3: #{tpu_custom_call.1} parent=1 // loop_header
      %s22 = sphi 0, %s26
      %p23 = scmp.ge.s32.totalorder %s22, 6
      %s32 = sphi 0, %s34
      %s35 = sphi 0, %s32
      %s36 = sphi 0, %s35
      %s52 = sphi 0, %s36
      %s58 = sphi 0, %s60
      %s61 = sphi 0, %s58
      %s62 = sphi 0, %s61
      %s78 = sphi 0, %s62
      %s84 = sphi 0, %s86
      %s87 = sphi 0, %s84
      %s88 = sphi 0, %s87
      %s104 = sphi 0, %s88
      %s108 = sphi 0, %s108
      %s110 = sphi 0, %s108
      %s111 = sphi 0, %s110
      %s125 = sphi 0, %s111
      %s129 = sphi 0, %s129
      %s131 = sphi 0, %s129
      %s132 = sphi 0, %s131
      %s146 = sphi 0, %s132
      %s150 = sphi 0, %s150
      %s152 = sphi 0, %s150
      %s153 = sphi 0, %s152
      %s167 = sphi 0, %s153
      %s173 = sphi 0, %s175
      %s176 = sphi 0, %s173
      %s177 = sphi 0, %s176
      %s193 = sphi 0, %s177
    $region4: #{tpu_custom_call.1} parent=1 // loop_header_branch
      %25 = sbr.rel (%p23) target = $region8
    $region5: #{tpu_custom_call.1} parent=1 // loop_body
      %s27 = ssub.s32 %s22, 1
      %s28 = ssub.s32 %s22, 2
      %s29 = sadd.s32 %s22, 1
      %s30 = ssub.s32 %s22, %s29
      %p31 = scmp.eq.s32.totalorder %s30, 0
      %s33 = sadd.s32 %s32, 1
      %s34 = scalar_select %p31, %s32, %s33
      %p37 = pneg %p31
      %p38 = scmp.eq.s32.totalorder %s22, 3
      %p39 = por %p37, %p38
      %p40 = scmp.ne.s32.totalorder %s32, %s35
      %p41 = scmp.eq.s32.totalorder %s22, 0
      %p42 = por %p40, %p41
      %p43 = scmp.ne.s32.totalorder %s32, %s35
      %p44 = scmp.eq.s32.totalorder %s27, 3
      %p45 = por %p43, %p44
      %p46 = scmp.ne.s32.totalorder %s35, %s36
      %p47 = scmp.eq.s32.totalorder %s27, 0
      %p48 = por %p46, %p47
      %p49 = scmp.ne.s32.totalorder %s35, %s36
      %p50 = scmp.eq.s32.totalorder %s28, 3
      %p51 = por %p49, %p50
      %p53 = scmp.ne.s32.totalorder %s36, %s52
      %p54 = scmp.eq.s32.totalorder %s28, 0
      %p55 = por %p53, %p54
      %s56 = ssub.s32 %s22, %s29
      %p57 = scmp.eq.s32.totalorder %s56, 0
      %s59 = sadd.s32 %s58, 1
      %s60 = scalar_select %p57, %s58, %s59
      %p63 = pneg %p57
      %p64 = scmp.eq.s32.totalorder %s22, 3
      %p65 = por %p63, %p64
      %p66 = scmp.ne.s32.totalorder %s58, %s61
      %p67 = scmp.eq.s32.totalorder %s22, 0
      %p68 = por %p66, %p67
      %p69 = scmp.ne.s32.totalorder %s58, %s61
      %p70 = scmp.eq.s32.totalorder %s27, 3
      %p71 = por %p69, %p70
      %p72 = scmp.ne.s32.totalorder %s61, %s62
      %p73 = scmp.eq.s32.totalorder %s27, 0
      %p74 = por %p72, %p73
      %p75 = scmp.ne.s32.totalorder %s61, %s62
      %p76 = scmp.eq.s32.totalorder %s28, 3
      %p77 = por %p75, %p76
      %p79 = scmp.ne.s32.totalorder %s62, %s78
      %p80 = scmp.eq.s32.totalorder %s28, 0
      %p81 = por %p79, %p80
      %s82 = ssub.s32 %s22, %s29
      %p83 = scmp.eq.s32.totalorder %s82, 0
      %s85 = sadd.s32 %s84, 1
      %s86 = scalar_select %p83, %s84, %s85
      %p89 = pneg %p83
      %p90 = scmp.eq.s32.totalorder %s22, 3
      %p91 = por %p89, %p90
      %p92 = scmp.ne.s32.totalorder %s84, %s87
      %p93 = scmp.eq.s32.totalorder %s22, 0
      %p94 = por %p92, %p93
      %p95 = scmp.ne.s32.totalorder %s84, %s87
      %p96 = scmp.eq.s32.totalorder %s27, 3
      %p97 = por %p95, %p96
      %p98 = scmp.ne.s32.totalorder %s87, %s88
      %p99 = scmp.eq.s32.totalorder %s27, 0
      %p100 = por %p98, %p99
      %p101 = scmp.ne.s32.totalorder %s87, %s88
      %p102 = scmp.eq.s32.totalorder %s28, 3
      %p103 = por %p101, %p102
      %p105 = scmp.ne.s32.totalorder %s88, %s104
      %p106 = scmp.eq.s32.totalorder %s28, 0
      %p107 = por %p105, %p106
      %s109 = sadd.s32 %s108, 1
      %p112 = scmp.eq.s32.totalorder %s22, 3
      %p113 = scmp.ne.s32.totalorder %s108, %s110
      %p114 = scmp.eq.s32.totalorder %s22, 0
      %p115 = por %p113, %p114
      %p116 = scmp.ne.s32.totalorder %s108, %s110
      %p117 = scmp.eq.s32.totalorder %s27, 3
      %p118 = por %p116, %p117
      %p119 = scmp.ne.s32.totalorder %s110, %s111
      %p120 = scmp.eq.s32.totalorder %s27, 0
      %p121 = por %p119, %p120
      %p122 = scmp.ne.s32.totalorder %s110, %s111
      %p123 = scmp.eq.s32.totalorder %s28, 3
      %p124 = por %p122, %p123
      %p126 = scmp.ne.s32.totalorder %s111, %s125
      %p127 = scmp.eq.s32.totalorder %s28, 0
      %p128 = por %p126, %p127
      %s130 = sadd.s32 %s129, 1
      %p133 = scmp.eq.s32.totalorder %s22, 3
      %p134 = scmp.ne.s32.totalorder %s129, %s131
      %p135 = scmp.eq.s32.totalorder %s22, 0
      %p136 = por %p134, %p135
      %p137 = scmp.ne.s32.totalorder %s129, %s131
      %p138 = scmp.eq.s32.totalorder %s27, 3
      %p139 = por %p137, %p138
      %p140 = scmp.ne.s32.totalorder %s131, %s132
      %p141 = scmp.eq.s32.totalorder %s27, 0
      %p142 = por %p140, %p141
      %p143 = scmp.ne.s32.totalorder %s131, %s132
      %p144 = scmp.eq.s32.totalorder %s28, 3
      %p145 = por %p143, %p144
      %p147 = scmp.ne.s32.totalorder %s132, %s146
      %p148 = scmp.eq.s32.totalorder %s28, 0
      %p149 = por %p147, %p148
      %s151 = sadd.s32 %s150, 1
      %p154 = scmp.eq.s32.totalorder %s22, 3
      %p155 = scmp.ne.s32.totalorder %s150, %s152
      %p156 = scmp.eq.s32.totalorder %s22, 0
      %p157 = por %p155, %p156
      %p158 = scmp.ne.s32.totalorder %s150, %s152
      %p159 = scmp.eq.s32.totalorder %s27, 3
      %p160 = por %p158, %p159
      %p161 = scmp.ne.s32.totalorder %s152, %s153
      %p162 = scmp.eq.s32.totalorder %s27, 0
      %p163 = por %p161, %p162
      %p164 = scmp.ne.s32.totalorder %s152, %s153
      %p165 = scmp.eq.s32.totalorder %s28, 3
      %p166 = por %p164, %p165
      %p168 = scmp.ne.s32.totalorder %s153, %s167
      %p169 = scmp.eq.s32.totalorder %s28, 0
      %p170 = por %p168, %p169
      %s171 = ssub.s32 %s22, %s29
      %p172 = scmp.eq.s32.totalorder %s171, 0
      %s174 = sadd.s32 %s173, 1
      %s175 = scalar_select %p172, %s173, %s174
      %p178 = pneg %p172
      %p179 = scmp.eq.s32.totalorder %s22, 3
      %p180 = por %p178, %p179
      %p181 = scmp.ne.s32.totalorder %s173, %s176
      %p182 = scmp.eq.s32.totalorder %s22, 0
      %p183 = por %p181, %p182
      %p184 = scmp.ne.s32.totalorder %s173, %s176
      %p185 = scmp.eq.s32.totalorder %s27, 3
      %p186 = por %p184, %p185
      %p187 = scmp.ne.s32.totalorder %s176, %s177
      %p188 = scmp.eq.s32.totalorder %s27, 0
      %p189 = por %p187, %p188
      %p190 = scmp.ne.s32.totalorder %s176, %s177
      %p191 = scmp.eq.s32.totalorder %s28, 3
      %p192 = por %p190, %p191
      %p194 = scmp.ne.s32.totalorder %s177, %s193
      %p195 = scmp.eq.s32.totalorder %s28, 0
      %p196 = por %p194, %p195
      %p197 = scmp.le.s32.totalorder 1, %s22
      %p198 = scmp.lt.s32.totalorder %s22, 5
      %p199 = pnand %p197, %p198
      %p200 = pneg %p199
      // Predicated region
      $region9: #{tpu_custom_call.1} parent=5 // pred_check
        _
      $region10: #{tpu_custom_call.1} parent=5 // pred_check_branch
        %202 = sbr.rel (%p199) target = $region12
      $region11: #{tpu_custom_call.1} parent=5 // pred_region
        %s203 = ssub.s32 %s22, 1
        // Predicated region
        $region13: #{tpu_custom_call.1} parent=11 // pred_check
          %p204 = pneg %p121
        $region14: #{tpu_custom_call.1} parent=11 // pred_check_branch
          %206 = sbr.rel (%p204) target = $region16
        $region15: #{tpu_custom_call.1} parent=11 // pred_region
          %s208 = ssub.s32 2048, 2048
          %209 = vsyncadd [#allocation9], %s208
          %s210 = sshll.u32 [#allocation8], 4
          %s211 = int_to_ptr.vmem [resolvable:$true] %s210
          %216 = dma.hbm_to_vmem [thread:$0]  %s3, 2048, %s211, [#allocation9], 128, 128, 8
        $region16: #{tpu_custom_call.1} parent=11 // pred_fallthru
          _
        // Predicated region
        $region17: #{tpu_custom_call.1} parent=11 // pred_check
          %p217 = pneg %p142
        $region18: #{tpu_custom_call.1} parent=11 // pred_check_branch
          %219 = sbr.rel (%p217) target = $region20
        $region19: #{tpu_custom_call.1} parent=11 // pred_region
          %s221 = ssub.s32 64, 64
          %222 = vsyncadd [#allocation9], %s221
          %s223 = sshll.u32 [#allocation10], 4
          %s224 = int_to_ptr.vmem [resolvable:$true] %s223
          %229 = dma.hbm_to_vmem [thread:$0]  %s4, 64, %s224, [#allocation9], 16, 16, 1
        $region20: #{tpu_custom_call.1} parent=11 // pred_fallthru
          _
        // Predicated region
        $region21: #{tpu_custom_call.1} parent=11 // pred_check
          %p230 = pneg %p163
        $region22: #{tpu_custom_call.1} parent=11 // pred_check_branch
          %232 = sbr.rel (%p230) target = $region24
        $region23: #{tpu_custom_call.1} parent=11 // pred_region
          _
        $region24: #{tpu_custom_call.1} parent=11 // pred_fallthru
          _
      $region12: #{tpu_custom_call.1} parent=5 // pred_fallthru
        _
      %p233 = scmp.lt.s32.totalorder %s22, 4
      // Predicated region
      $region25: #{tpu_custom_call.1} parent=5 // pred_check
        %p234 = pneg %p233
      $region26: #{tpu_custom_call.1} parent=5 // pred_check_branch
        %236 = sbr.rel (%p234) target = $region28
      $region27: #{tpu_custom_call.1} parent=5 // pred_region
        // Predicated region
        $region29: #{tpu_custom_call.1} parent=27 // pred_check
          %p237 = pneg %p42
        $region30: #{tpu_custom_call.1} parent=27 // pred_check_branch
          %239 = sbr.rel (%p237) target = $region32
        $region31: #{tpu_custom_call.1} parent=27 // pred_region
          %s240 = sand.u32 %s32, 1
          %s241 = scalar_lea.sflag [#allocation3], %s240
          %s242 = sand.u32 %s32, 1
          %s243 = smul.addr %s242, 16
          %s244 = scalar_lea.vmem [#allocation2], %s243
          %s245 = smul.u32 2, %s22
          %s247 = ssub.s32 256, 256
          %248 = vsyncadd %s241, %s247
          %s249 = smul.addr %s245, 128
          %s250 = scalar_lea.hbm %s0, %s249
          %s251 = sshll.u32 %s244, 4
          %s252 = int_to_ptr.vmem [resolvable:$true] %s251
          %257 = dma.hbm_to_vmem [thread:$0]  %s250, 256, %s252, %s241, 128, 128, 8
        $region32: #{tpu_custom_call.1} parent=27 // pred_fallthru
          _
        // Predicated region
        $region33: #{tpu_custom_call.1} parent=27 // pred_check
          %p258 = pneg %p68
        $region34: #{tpu_custom_call.1} parent=27 // pred_check_branch
          %260 = sbr.rel (%p258) target = $region36
        $region35: #{tpu_custom_call.1} parent=27 // pred_region
          %s261 = sand.u32 %s22, 1
          %s262 = scalar_lea.sflag [#allocation6], %s261
          %s263 = sand.u32 %s58, 1
          %s264 = smul.addr %s263, 16
          %s265 = scalar_lea.vmem [#allocation5], %s264
          %s266 = smul.u32 2, %s22
          %s268 = ssub.s32 256, 256
          %269 = vsyncadd %s262, %s268
          %s270 = smul.addr %s266, 128
          %s271 = scalar_lea.hbm %s1, %s270
          %s272 = sshll.u32 %s265, 4
          %s273 = int_to_ptr.vmem [resolvable:$true] %s272
          %278 = dma.hbm_to_vmem [thread:$0]  %s271, 256, %s273, %s262, 128, 128, 8
        $region36: #{tpu_custom_call.1} parent=27 // pred_fallthru
          _
        // Predicated region
        $region37: #{tpu_custom_call.1} parent=27 // pred_check
          %p279 = pneg %p94
        $region38: #{tpu_custom_call.1} parent=27 // pred_check_branch
          %281 = sbr.rel (%p279) target = $region40
        $region39: #{tpu_custom_call.1} parent=27 // pred_region
          %s282 = sand.u32 %s22, 1
          %s283 = scalar_lea.sflag [#allocation6], %s282
          %s284 = sand.u32 %s84, 1
          %s285 = smul.addr %s284, 16
          %s286 = scalar_lea.vmem [#allocation7], %s285
          %s287 = smul.u32 2, %s22
          %s289 = ssub.s32 256, 256
          %290 = vsyncadd %s283, %s289
          %s291 = smul.addr %s287, 128
          %s292 = scalar_lea.hbm %s2, %s291
          %s293 = sshll.u32 %s286, 4
          %s294 = int_to_ptr.vmem [resolvable:$true] %s293
          %299 = dma.hbm_to_vmem [thread:$0]  %s292, 256, %s294, %s283, 128, 128, 8
        $region40: #{tpu_custom_call.1} parent=27 // pred_fallthru
          _
      $region28: #{tpu_custom_call.1} parent=5 // pred_fallthru
        _
      %p300 = scmp.le.s32.totalorder 1, %s22
      %p301 = scmp.lt.s32.totalorder %s22, 5
      %p302 = pnand %p300, %p301
      %p303 = pneg %p302
      // Predicated region
      $region41: #{tpu_custom_call.1} parent=5 // pred_check
        _
      $region42: #{tpu_custom_call.1} parent=5 // pred_check_branch
        %305 = sbr.rel (%p302) target = $region44
      $region43: #{tpu_custom_call.1} parent=5 // pred_region
        %s306 = ssub.s32 %s22, 1
        %s307 = sand.u32 %s35, 1
        %s308 = scalar_lea.sflag [#allocation3], %s307
        %s309 = sand.u32 %s35, 1
        %s310 = smul.addr %s309, 16
        %s311 = scalar_lea.vmem [#allocation2], %s310
        // Predicated region
        $region45: #{tpu_custom_call.1} parent=43 // pred_check
          %p312 = pneg %p48
        $region46: #{tpu_custom_call.1} parent=43 // pred_check_branch
          %314 = sbr.rel (%p312) target = $region48
        $region47: #{tpu_custom_call.1} parent=43 // pred_region
          %315 = dma.done %s308, 256
        $region48: #{tpu_custom_call.1} parent=43 // pred_fallthru
          _
        %s316 = sand.u32 %s27, 1
        %s317 = scalar_lea.sflag [#allocation6], %s316
        %s318 = sand.u32 %s61, 1
        %s319 = smul.addr %s318, 16
        %s320 = scalar_lea.vmem [#allocation5], %s319
        // Predicated region
        $region49: #{tpu_custom_call.1} parent=43 // pred_check
          %p321 = pneg %p74
        $region50: #{tpu_custom_call.1} parent=43 // pred_check_branch
          %323 = sbr.rel (%p321) target = $region52
        $region51: #{tpu_custom_call.1} parent=43 // pred_region
          %324 = dma.done %s317, 256
        $region52: #{tpu_custom_call.1} parent=43 // pred_fallthru
          _
        %s325 = sand.u32 %s27, 1
        %s326 = scalar_lea.sflag [#allocation6], %s325
        %s327 = sand.u32 %s87, 1
        %s328 = smul.addr %s327, 16
        %s329 = scalar_lea.vmem [#allocation7], %s328
        // Predicated region
        $region53: #{tpu_custom_call.1} parent=43 // pred_check
          %p330 = pneg %p100
        $region54: #{tpu_custom_call.1} parent=43 // pred_check_branch
          %332 = sbr.rel (%p330) target = $region56
        $region55: #{tpu_custom_call.1} parent=43 // pred_region
          %333 = dma.done %s326, 256
        $region56: #{tpu_custom_call.1} parent=43 // pred_fallthru
          _
        // Predicated region
        $region57: #{tpu_custom_call.1} parent=43 // pred_check
          %p334 = pneg %p121
        $region58: #{tpu_custom_call.1} parent=43 // pred_check_branch
          %336 = sbr.rel (%p334) target = $region60
        $region59: #{tpu_custom_call.1} parent=43 // pred_region
          %337 = dma.done [#allocation9], 2048
        $region60: #{tpu_custom_call.1} parent=43 // pred_fallthru
          _
        // Predicated region
        $region61: #{tpu_custom_call.1} parent=43 // pred_check
          %p338 = pneg %p142
        $region62: #{tpu_custom_call.1} parent=43 // pred_check_branch
          %340 = sbr.rel (%p338) target = $region64
        $region63: #{tpu_custom_call.1} parent=43 // pred_region
          %341 = dma.done [#allocation9], 64
        $region64: #{tpu_custom_call.1} parent=43 // pred_fallthru
          _
        %s342 = sand.u32 %s35, 1
        %s343 = scalar_lea.sflag [#allocation3], %s342
        %s344 = sand.u32 %s35, 1
        %s345 = smul.addr %s344, 16
        %s346 = scalar_lea.vmem [#allocation2], %s345
        %p347 = pneg %p48
        %p348 = pneg %p45
        %s349 = sand.u32 %s27, 1
        %s350 = scalar_lea.sflag [#allocation6], %s349
        %s351 = sand.u32 %s61, 1
        %s352 = smul.addr %s351, 16
        %s353 = scalar_lea.vmem [#allocation5], %s352
        %p354 = pneg %p74
        %p355 = pneg %p71
        %s356 = sand.u32 %s27, 1
        %s357 = scalar_lea.sflag [#allocation6], %s356
        %s358 = sand.u32 %s87, 1
        %s359 = smul.addr %s358, 16
        %s360 = scalar_lea.vmem [#allocation7], %s359
        %p361 = pneg %p100
        %p362 = pneg %p97
        %p363 = pneg %p121
        %p364 = pneg %p118
        %p365 = pneg %p142
        %p366 = pneg %p139
        %p367 = pneg %p163
        %p368 = pneg %p160
        %p369 = pneg %p189
        %p370 = pneg %p186
        %s371 = sand.u32 %s176, 1
        %s372 = scalar_lea.sflag [#allocation4], %s371
        %s373 = sand.u32 %s176, 1
        %s374 = smul.addr %s373, 16
        %s375 = scalar_lea.vmem [#allocation11], %s374
        %s376 = smul.u32 2, %s27
        %s377 = smul.u32 2, %s27
        %s378 = smul.u32 2, %s27
        %s379 = smul.u32 2, %s27
        %v380 = vld [vmem:[%s311] sm:$0xff]
        %v381 = vld [vmem:[%s311 + $0x8] sm:$0xff]
        %v382 = vld [vmem:[%s320] sm:$0xff]
        %v383 = vld [vmem:[%s320 + $0x8] sm:$0xff]
        %v384 = vld [vmem:[%s329] sm:$0xff]
        %v385 = vld [vmem:[%s329 + $0x8] sm:$0xff]
        %v386 = vld [vmem:[#allocation8] sm:$0xff]
        %v387 = vld [vmem:[#allocation8 + $0x8] sm:$0xff]
        %v388 = vld [vmem:[#allocation8 + $0x10] sm:$0xff]
        %v389 = vld [vmem:[#allocation8 + $0x18] sm:$0xff]
        %v390 = vld [vmem:[#allocation10] sm:$0x1]
        %v392 = vlaneseq
        %v393 = vshrl.u32 %v392, 7
        %v394 = vsub.s32 0, %v393
        %v395 = vrot.slane %v390, %v394
        %vm397 = vcmask 261120
        %v399 = vsel %vm397, %v380, 0
        %v402 = vsel %vm397, %v381, 0
        %404 = vmatprep.subr.mxu0 0.0
        %405 = vmatpush1.msra.mxu0 %v386
        %406 = vmatprep.subr.mxu0 0.0
        %407 = vmatpush1.msra.mxu0 %v387
        %408 = vmatprep.subr.mxu0 0.0
        %409 = vmatpush1.msra.mxu0 %v388
        %410 = vmatprep.subr.mxu0 0.0
        %411 = vmatpush1.msra.mxu0 %v389
        %412 = vmatprep.subr.mxu0 0.0
        %413 = vmatpush1.msra.mxu0 0.0
        %414 = vmatprep.subr.mxu0 0.0
        %415 = vmatpush1.msra.mxu0 0.0
        %416 = vmatprep.subr.mxu0 0.0
        %417 = vmatpush1.msra.mxu0 0.0
        %418 = vmatprep.subr.mxu0 0.0
        %419 = vmatpush1.msra.mxu0 0.0
        %420 = vmatprep.subr.mxu0 0.0
        %421 = vmatpush1.msra.mxu0 0.0
        %422 = vmatprep.subr.mxu0 0.0
        %423 = vmatpush1.msra.mxu0 0.0
        %424 = vmatprep.subr.mxu0 0.0
        %425 = vmatpush1.msra.mxu0 0.0
        %426 = vmatprep.subr.mxu0 0.0
        %427 = vmatpush1.msra.mxu0 0.0
        %428 = vmatprep.subr.mxu0 0.0
        %429 = vmatpush1.msra.mxu0 0.0
        %430 = vmatprep.subr.mxu0 0.0
        %431 = vmatpush1.msra.mxu0 0.0
        %432 = vmatprep.subr.mxu0 0.0
        %433 = vmatpush1.msra.mxu0 0.0
        %434 = vmatprep.subr.mxu0 0.0
        %435 = vmatpush1.msra.mxu0 0.0
        %436 = vmatprep.subr.mxu0 0.0
        %437 = vmatpush1.msra.mxu0 0.0
        %438 = vmatprep.subr.mxu0 0.0
        %439 = vmatpush1.msra.mxu0 0.0
        %440 = vmatprep.subr.mxu0 0.0
        %441 = vmatpush1.msra.mxu0 0.0
        %442 = vmatprep.subr.mxu0 0.0
        %443 = vmatpush1.msra.mxu0 0.0
        %444 = vmatprep.subr.mxu0 0.0
        %445 = vmatpush1.msra.mxu0 0.0
        %446 = vmatprep.subr.mxu0 0.0
        %447 = vmatpush1.msra.mxu0 0.0
        %448 = vmatprep.subr.mxu0 0.0
        %449 = vmatpush1.msra.mxu0 0.0
        %450 = vmatprep.subr.mxu0 0.0
        %451 = vmatpush1.msra.mxu0 0.0
        %452 = vmatprep.subr.mxu0 0.0
        %453 = vmatpush1.msra.mxu0 0.0
        %454 = vmatprep.subr.mxu0 0.0
        %455 = vmatpush1.msra.mxu0 0.0
        %456 = vmatprep.subr.mxu0 0.0
        %457 = vmatpush1.msra.mxu0 0.0
        %458 = vmatprep.subr.mxu0 0.0
        %459 = vmatpush1.msra.mxu0 0.0
        %460 = vmatprep.subr.mxu0 0.0
        %461 = vmatpush1.msra.mxu0 0.0
        %462 = vmatprep.subr.mxu0 0.0
        %463 = vmatpush1.msra.mxu0 0.0
        %464 = vmatprep.subr.mxu0 0.0
        %465 = vmatpush1.msra.mxu0 0.0
        %466 = vmatprep.subr.mxu0 0.0
        %467 = vmatpush1.msra.mxu0 0.0
        %468 = vmatprep.mubr.f32.mxu0 0.0
        %469 = vmatmul.mubr.f32.gmra.mrb[0].mxu0 %v399
        %v470 = vpop.f32.mrb[0].mxu0
        %v471 = vadd.f32 %v395, %v470
        %v472 = vpop.f32.mrb[0].mxu0
        %473 = vmatprep.mubr.f32.mxu0 0.0
        %474 = vmatmul.mubr.f32.gmra.mrb[0].mxu0 %v402
        %v475 = vpop.f32.mrb[0].mxu0
        %v476 = vadd.f32 %v395, %v475
        %v477 = vpop.f32.mrb[0].mxu0
        %478 = vdwg.mxu0
        %s479 = scalar_lea.vmem [#allocation8], 32
        %v480 = vld [vmem:[%s479] sm:$0xff]
        %v481 = vld [vmem:[%s479 + $0x8] sm:$0xff]
        %v482 = vld [vmem:[%s479 + $0x10] sm:$0xff]
        %v483 = vld [vmem:[%s479 + $0x18] sm:$0xff]
        %s484 = scalar_lea.vmem [#allocation10], 1
        %v485 = vld [vmem:[%s484] sm:$0x1]
        %v487 = vlaneseq
        %v488 = vshrl.u32 %v487, 7
        %v489 = vsub.s32 0, %v488
        %v490 = vrot.slane %v485, %v489
        %v493 = vsel %vm397, %v382, 0
        %v496 = vsel %vm397, %v383, 0
        %498 = vmatprep.subr.mxu0 0.0
        %499 = vmatpush1.msra.mxu0 %v480
        %500 = vmatprep.subr.mxu0 0.0
        %501 = vmatpush1.msra.mxu0 %v481
        %502 = vmatprep.subr.mxu0 0.0
        %503 = vmatpush1.msra.mxu0 %v482
        %504 = vmatprep.subr.mxu0 0.0
        %505 = vmatpush1.msra.mxu0 %v483
        %506 = vmatprep.subr.mxu0 0.0
        %507 = vmatpush1.msra.mxu0 0.0
        %508 = vmatprep.subr.mxu0 0.0
        %509 = vmatpush1.msra.mxu0 0.0
        %510 = vmatprep.subr.mxu0 0.0
        %511 = vmatpush1.msra.mxu0 0.0
        %512 = vmatprep.subr.mxu0 0.0
        %513 = vmatpush1.msra.mxu0 0.0
        %514 = vmatprep.subr.mxu0 0.0
        %515 = vmatpush1.msra.mxu0 0.0
        %516 = vmatprep.subr.mxu0 0.0
        %517 = vmatpush1.msra.mxu0 0.0
        %518 = vmatprep.subr.mxu0 0.0
        %519 = vmatpush1.msra.mxu0 0.0
        %520 = vmatprep.subr.mxu0 0.0
        %521 = vmatpush1.msra.mxu0 0.0
        %522 = vmatprep.subr.mxu0 0.0
        %523 = vmatpush1.msra.mxu0 0.0
        %524 = vmatprep.subr.mxu0 0.0
        %525 = vmatpush1.msra.mxu0 0.0
        %526 = vmatprep.subr.mxu0 0.0
        %527 = vmatpush1.msra.mxu0 0.0
        %528 = vmatprep.subr.mxu0 0.0
        %529 = vmatpush1.msra.mxu0 0.0
        %530 = vmatprep.subr.mxu0 0.0
        %531 = vmatpush1.msra.mxu0 0.0
        %532 = vmatprep.subr.mxu0 0.0
        %533 = vmatpush1.msra.mxu0 0.0
        %534 = vmatprep.subr.mxu0 0.0
        %535 = vmatpush1.msra.mxu0 0.0
        %536 = vmatprep.subr.mxu0 0.0
        %537 = vmatpush1.msra.mxu0 0.0
        %538 = vmatprep.subr.mxu0 0.0
        %539 = vmatpush1.msra.mxu0 0.0
        %540 = vmatprep.subr.mxu0 0.0
        %541 = vmatpush1.msra.mxu0 0.0
        %542 = vmatprep.subr.mxu0 0.0
        %543 = vmatpush1.msra.mxu0 0.0
        %544 = vmatprep.subr.mxu0 0.0
        %545 = vmatpush1.msra.mxu0 0.0
        %546 = vmatprep.subr.mxu0 0.0
        %547 = vmatpush1.msra.mxu0 0.0
        %548 = vmatprep.subr.mxu0 0.0
        %549 = vmatpush1.msra.mxu0 0.0
        %550 = vmatprep.subr.mxu0 0.0
        %551 = vmatpush1.msra.mxu0 0.0
        %552 = vmatprep.subr.mxu0 0.0
        %553 = vmatpush1.msra.mxu0 0.0
        %554 = vmatprep.subr.mxu0 0.0
        %555 = vmatpush1.msra.mxu0 0.0
        %556 = vmatprep.subr.mxu0 0.0
        %557 = vmatpush1.msra.mxu0 0.0
        %558 = vmatprep.subr.mxu0 0.0
        %559 = vmatpush1.msra.mxu0 0.0
        %560 = vmatprep.subr.mxu0 0.0
        %561 = vmatpush1.msra.mxu0 0.0
        %562 = vmatprep.mubr.f32.mxu0 0.0
        %563 = vmatmul.mubr.f32.gmra.mrb[0].mxu0 %v493
        %v564 = vpop.f32.mrb[0].mxu0
        %v565 = vadd.f32 %v490, %v564
        %v566 = vpop.f32.mrb[0].mxu0
        %567 = vmatprep.mubr.f32.mxu0 0.0
        %568 = vmatmul.mubr.f32.gmra.mrb[0].mxu0 %v496
        %v569 = vpop.f32.mrb[0].mxu0
        %v570 = vadd.f32 %v490, %v569
        %v571 = vpop.f32.mrb[0].mxu0
        %572 = vdwg.mxu0
        %s573 = scalar_lea.vmem [#allocation8], 64
        %v574 = vld [vmem:[%s573] sm:$0xff]
        %v575 = vld [vmem:[%s573 + $0x8] sm:$0xff]
        %v576 = vld [vmem:[%s573 + $0x10] sm:$0xff]
        %v577 = vld [vmem:[%s573 + $0x18] sm:$0xff]
        %s578 = scalar_lea.vmem [#allocation10], 2
        %v579 = vld [vmem:[%s578] sm:$0x1]
        %v581 = vlaneseq
        %v582 = vshrl.u32 %v581, 7
        %v583 = vsub.s32 0, %v582
        %v584 = vrot.slane %v579, %v583
        %v587 = vsel %vm397, %v384, 0
        %v590 = vsel %vm397, %v385, 0
        %592 = vmatprep.subr.mxu0 0.0
        %593 = vmatpush1.msra.mxu0 %v574
        %594 = vmatprep.subr.mxu0 0.0
        %595 = vmatpush1.msra.mxu0 %v575
        %596 = vmatprep.subr.mxu0 0.0
        %597 = vmatpush1.msra.mxu0 %v576
        %598 = vmatprep.subr.mxu0 0.0
        %599 = vmatpush1.msra.mxu0 %v577
        %600 = vmatprep.subr.mxu0 0.0
        %601 = vmatpush1.msra.mxu0 0.0
        %602 = vmatprep.subr.mxu0 0.0
        %603 = vmatpush1.msra.mxu0 0.0
        %604 = vmatprep.subr.mxu0 0.0
        %605 = vmatpush1.msra.mxu0 0.0
        %606 = vmatprep.subr.mxu0 0.0
        %607 = vmatpush1.msra.mxu0 0.0
        %608 = vmatprep.subr.mxu0 0.0
        %609 = vmatpush1.msra.mxu0 0.0
        %610 = vmatprep.subr.mxu0 0.0
        %611 = vmatpush1.msra.mxu0 0.0
        %612 = vmatprep.subr.mxu0 0.0
        %613 = vmatpush1.msra.mxu0 0.0
        %614 = vmatprep.subr.mxu0 0.0
        %615 = vmatpush1.msra.mxu0 0.0
        %616 = vmatprep.subr.mxu0 0.0
        %617 = vmatpush1.msra.mxu0 0.0
        %618 = vmatprep.subr.mxu0 0.0
        %619 = vmatpush1.msra.mxu0 0.0
        %620 = vmatprep.subr.mxu0 0.0
        %621 = vmatpush1.msra.mxu0 0.0
        %622 = vmatprep.subr.mxu0 0.0
        %623 = vmatpush1.msra.mxu0 0.0
        %624 = vmatprep.subr.mxu0 0.0
        %625 = vmatpush1.msra.mxu0 0.0
        %626 = vmatprep.subr.mxu0 0.0
        %627 = vmatpush1.msra.mxu0 0.0
        %628 = vmatprep.subr.mxu0 0.0
        %629 = vmatpush1.msra.mxu0 0.0
        %630 = vmatprep.subr.mxu0 0.0
        %631 = vmatpush1.msra.mxu0 0.0
        %632 = vmatprep.subr.mxu0 0.0
        %633 = vmatpush1.msra.mxu0 0.0
        %634 = vmatprep.subr.mxu0 0.0
        %635 = vmatpush1.msra.mxu0 0.0
        %636 = vmatprep.subr.mxu0 0.0
        %637 = vmatpush1.msra.mxu0 0.0
        %638 = vmatprep.subr.mxu0 0.0
        %639 = vmatpush1.msra.mxu0 0.0
        %640 = vmatprep.subr.mxu0 0.0
        %641 = vmatpush1.msra.mxu0 0.0
        %642 = vmatprep.subr.mxu0 0.0
        %643 = vmatpush1.msra.mxu0 0.0
        %644 = vmatprep.subr.mxu0 0.0
        %645 = vmatpush1.msra.mxu0 0.0
        %646 = vmatprep.subr.mxu0 0.0
        %647 = vmatpush1.msra.mxu0 0.0
        %648 = vmatprep.subr.mxu0 0.0
        %649 = vmatpush1.msra.mxu0 0.0
        %650 = vmatprep.subr.mxu0 0.0
        %651 = vmatpush1.msra.mxu0 0.0
        %652 = vmatprep.subr.mxu0 0.0
        %653 = vmatpush1.msra.mxu0 0.0
        %654 = vmatprep.subr.mxu0 0.0
        %655 = vmatpush1.msra.mxu0 0.0
        %656 = vmatprep.mubr.f32.mxu0 0.0
        %657 = vmatmul.mubr.f32.gmra.mrb[0].mxu0 %v587
        %v658 = vpop.f32.mrb[0].mxu0
        %v659 = vadd.f32 %v584, %v658
        %v660 = vpop.f32.mrb[0].mxu0
        %661 = vmatprep.mubr.f32.mxu0 0.0
        %662 = vmatmul.mubr.f32.gmra.mrb[0].mxu0 %v590
        %v663 = vpop.f32.mrb[0].mxu0
        %v664 = vadd.f32 %v584, %v663
        %v665 = vpop.f32.mrb[0].mxu0
        %666 = vdwg.mxu0
        %v667 = vld [vmem:[%s5] sm:$0xff]
        %v668 = vld [vmem:[%s5 + $0x8] sm:$0xff]
        %vm669 = vcmask 64512
        %v671 = vsel %vm669, %v471, 0
        %v674 = vsel %vm669, %v476, 0
        %v677 = vsel %vm669, %v565, 0
        %v680 = vsel %vm669, %v570, 0
        %682 = vmatprep.subr.mxu0 0.0
        %683 = vmatpush1.xpose.msra.mxu0 %v677
        %684 = vmatprep.subr.mxu0 0.0
        %685 = vmatpush1.xpose.msra.mxu0 %v680
        %686 = vmatprep.subr.mxu0 0.0
        %687 = vmatpush1.xpose.msra.mxu0 0.0
        %688 = vmatprep.subr.mxu0 0.0
        %689 = vmatpush1.xpose.msra.mxu0 0.0
        %690 = vmatprep.subr.mxu0 0.0
        %691 = vmatpush1.xpose.msra.mxu0 0.0
        %692 = vmatprep.subr.mxu0 0.0
        %693 = vmatpush1.xpose.msra.mxu0 0.0
        %694 = vmatprep.subr.mxu0 0.0
        %695 = vmatpush1.xpose.msra.mxu0 0.0
        %696 = vmatprep.subr.mxu0 0.0
        %697 = vmatpush1.xpose.msra.mxu0 0.0
        %698 = vmatprep.subr.mxu0 0.0
        %699 = vmatpush1.xpose.msra.mxu0 0.0
        %700 = vmatprep.subr.mxu0 0.0
        %701 = vmatpush1.xpose.msra.mxu0 0.0
        %702 = vmatprep.subr.mxu0 0.0
        %703 = vmatpush1.xpose.msra.mxu0 0.0
        %704 = vmatprep.subr.mxu0 0.0
        %705 = vmatpush1.xpose.msra.mxu0 0.0
        %706 = vmatprep.subr.mxu0 0.0
        %707 = vmatpush1.xpose.msra.mxu0 0.0
        %708 = vmatprep.subr.mxu0 0.0
        %709 = vmatpush1.xpose.msra.mxu0 0.0
        %710 = vmatprep.subr.mxu0 0.0
        %711 = vmatpush1.xpose.msra.mxu0 0.0
        %712 = vmatprep.subr.mxu0 0.0
        %713 = vmatpush1.xpose.msra.mxu0 0.0
        %714 = vmatprep.subr.mxu0 0.0
        %715 = vmatpush1.xpose.msra.mxu0 0.0
        %716 = vmatprep.subr.mxu0 0.0
        %717 = vmatpush1.xpose.msra.mxu0 0.0
        %718 = vmatprep.subr.mxu0 0.0
        %719 = vmatpush1.xpose.msra.mxu0 0.0
        %720 = vmatprep.subr.mxu0 0.0
        %721 = vmatpush1.xpose.msra.mxu0 0.0
        %722 = vmatprep.subr.mxu0 0.0
        %723 = vmatpush1.xpose.msra.mxu0 0.0
        %724 = vmatprep.subr.mxu0 0.0
        %725 = vmatpush1.xpose.msra.mxu0 0.0
        %726 = vmatprep.subr.mxu0 0.0
        %727 = vmatpush1.xpose.msra.mxu0 0.0
        %728 = vmatprep.subr.mxu0 0.0
        %729 = vmatpush1.xpose.msra.mxu0 0.0
        %730 = vmatprep.subr.mxu0 0.0
        %731 = vmatpush1.xpose.msra.mxu0 0.0
        %732 = vmatprep.subr.mxu0 0.0
        %733 = vmatpush1.xpose.msra.mxu0 0.0
        %734 = vmatprep.subr.mxu0 0.0
        %735 = vmatpush1.xpose.msra.mxu0 0.0
        %736 = vmatprep.subr.mxu0 0.0
        %737 = vmatpush1.xpose.msra.mxu0 0.0
        %738 = vmatprep.subr.mxu0 0.0
        %739 = vmatpush1.xpose.msra.mxu0 0.0
        %740 = vmatprep.subr.mxu0 0.0
        %741 = vmatpush1.xpose.msra.mxu0 0.0
        %742 = vmatprep.subr.mxu0 0.0
        %743 = vmatpush1.xpose.msra.mxu0 0.0
        %744 = vmatprep.subr.mxu0 0.0
        %745 = vmatpush1.xpose.msra.mxu0 0.0
        %746 = vmatprep.mubr.f32.mxu0 0.0
        %747 = vmatmul.mubr.f32.gmra.mrb[0].mxu0 %v671
        %v748 = vpop.f32.mrb[0].mxu0
        %v749 = vadd.f32 %v667, %v748
        %v750 = vpop.f32.mrb[0].mxu0
        %751 = vmatprep.mubr.f32.mxu0 0.0
        %752 = vmatmul.mubr.f32.gmra.mrb[0].mxu0 %v674
        %v753 = vpop.f32.mrb[0].mxu0
        %v754 = vadd.f32 %v668, %v753
        %v755 = vpop.f32.mrb[0].mxu0
        %756 = vdwg.mxu0
        %vm757 = vcmask 130048
        %v758 = vsel %vm757, %v749, -inf
        %759 = vmax.xlane.f32.xlu0 %v758
        %v760 = vpop.xlane.xlu0 %759
        %v761 = vsel %vm757, %v754, -inf
        %762 = vmax.xlane.f32.xlu0 %v761
        %v763 = vpop.xlane.xlu0 %762
        %v764 = vsub.f32 %v749, %v760
        %v765 = vsub.f32 %v754, %v763
        %v766 = vmul.f32 %v764, 1.442695
        %v767 = vpow.pop %v766
        %v768 = vmul.f32 %v765, 1.442695
        %v769 = vpow.pop %v768
        %v770 = vsel %vm757, %v767, 0.0
        %771 = vadd.xlane.f32.xlu0 %v770
        %v772 = vpop.xlane.xlu0 %771
        %v773 = vsel %vm757, %v769, 0.0
        %774 = vadd.xlane.f32.xlu0 %v773
        %v775 = vpop.xlane.xlu0 %774
        %v777 = vsel %vm757, %v767, 0
        %v780 = vsel %vm757, %v769, 0
        %782 = vmatprep.subr.mxu0 0.0
        %783 = vmatpush1.msra.mxu0 %v659
        %784 = vmatprep.subr.mxu0 0.0
        %785 = vmatpush1.msra.mxu0 %v664
        %786 = vmatprep.subr.mxu0 0.0
        %787 = vmatpush1.msra.mxu0 0.0
        %788 = vmatprep.subr.mxu0 0.0
        %789 = vmatpush1.msra.mxu0 0.0
        %790 = vmatprep.subr.mxu0 0.0
        %791 = vmatpush1.msra.mxu0 0.0
        %792 = vmatprep.subr.mxu0 0.0
        %793 = vmatpush1.msra.mxu0 0.0
        %794 = vmatprep.subr.mxu0 0.0
        %795 = vmatpush1.msra.mxu0 0.0
        %796 = vmatprep.subr.mxu0 0.0
        %797 = vmatpush1.msra.mxu0 0.0
        %798 = vmatprep.subr.mxu0 0.0
        %799 = vmatpush1.msra.mxu0 0.0
        %800 = vmatprep.subr.mxu0 0.0
        %801 = vmatpush1.msra.mxu0 0.0
        %802 = vmatprep.subr.mxu0 0.0
        %803 = vmatpush1.msra.mxu0 0.0
        %804 = vmatprep.subr.mxu0 0.0
        %805 = vmatpush1.msra.mxu0 0.0
        %806 = vmatprep.subr.mxu0 0.0
        %807 = vmatpush1.msra.mxu0 0.0
        %808 = vmatprep.subr.mxu0 0.0
        %809 = vmatpush1.msra.mxu0 0.0
        %810 = vmatprep.subr.mxu0 0.0
        %811 = vmatpush1.msra.mxu0 0.0
        %812 = vmatprep.subr.mxu0 0.0
        %813 = vmatpush1.msra.mxu0 0.0
        %814 = vmatprep.subr.mxu0 0.0
        %815 = vmatpush1.msra.mxu0 0.0
        %816 = vmatprep.subr.mxu0 0.0
        %817 = vmatpush1.msra.mxu0 0.0
        %818 = vmatprep.subr.mxu0 0.0
        %819 = vmatpush1.msra.mxu0 0.0
        %820 = vmatprep.subr.mxu0 0.0
        %821 = vmatpush1.msra.mxu0 0.0
        %822 = vmatprep.subr.mxu0 0.0
        %823 = vmatpush1.msra.mxu0 0.0
        %824 = vmatprep.subr.mxu0 0.0
        %825 = vmatpush1.msra.mxu0 0.0
        %826 = vmatprep.subr.mxu0 0.0
        %827 = vmatpush1.msra.mxu0 0.0
        %828 = vmatprep.subr.mxu0 0.0
        %829 = vmatpush1.msra.mxu0 0.0
        %830 = vmatprep.subr.mxu0 0.0
        %831 = vmatpush1.msra.mxu0 0.0
        %832 = vmatprep.subr.mxu0 0.0
        %833 = vmatpush1.msra.mxu0 0.0
        %834 = vmatprep.subr.mxu0 0.0
        %835 = vmatpush1.msra.mxu0 0.0
        %836 = vmatprep.subr.mxu0 0.0
        %837 = vmatpush1.msra.mxu0 0.0
        %838 = vmatprep.subr.mxu0 0.0
        %839 = vmatpush1.msra.mxu0 0.0
        %840 = vmatprep.subr.mxu0 0.0
        %841 = vmatpush1.msra.mxu0 0.0
        %842 = vmatprep.subr.mxu0 0.0
        %843 = vmatpush1.msra.mxu0 0.0
        %844 = vmatprep.subr.mxu0 0.0
        %845 = vmatpush1.msra.mxu0 0.0
        %846 = vmatprep.mubr.f32.mxu0 0.0
        %847 = vmatmul.mubr.f32.gmra.mrb[0].mxu0 %v777
        %v848 = vpop.f32.mrb[0].mxu0
        %v849 = vadd.f32 0.0, %v848
        %v850 = vpop.f32.mrb[0].mxu0
        %851 = vmatprep.mubr.f32.mxu0 0.0
        %852 = vmatmul.mubr.f32.gmra.mrb[0].mxu0 %v780
        %v853 = vpop.f32.mrb[0].mxu0
        %v854 = vadd.f32 0.0, %v853
        %v855 = vpop.f32.mrb[0].mxu0
        %856 = vdwg.mxu0
        %v857 = vrcp.pop %v772
        %v858 = vrcp.pop %v775
        %v859 = vmul.f32 %v772, %v857
        %v860 = vmul.f32 %v775, %v858
        %v861 = vsub.f32 2.0, %v859
        %v862 = vsub.f32 2.0, %v860
        %v863 = vmul.f32 %v857, %v861
        %v864 = vmul.f32 %v858, %v862
        %v865 = vmul.f32 %v849, %v863
        %v866 = vmul.f32 %v854, %v864
        %867 = vrot.lane.b32.xlu0 %v471, 120
        %v868 = vpop.permute.xlu0 %867
        %869 = vrot.lane.b32.xlu0 %v476, 120
        %v870 = vpop.permute.xlu0 %869
        %871 = vrot.lane.b32.xlu0 %v565, 120
        %v872 = vpop.permute.xlu0 %871
        %873 = vrot.lane.b32.xlu0 %v570, 120
        %v874 = vpop.permute.xlu0 %873
        %v875 = vsel %vm669, %v868, 0
        %v877 = vsel %vm669, %v870, 0
        %v879 = vsel %vm669, %v872, 0
        %v881 = vsel %vm669, %v874, 0
        %883 = vmatprep.subr.mxu0 0.0
        %884 = vmatpush1.xpose.msra.mxu0 %v879
        %885 = vmatprep.subr.mxu0 0.0
        %886 = vmatpush1.xpose.msra.mxu0 %v881
        %887 = vmatprep.subr.mxu0 0.0
        %888 = vmatpush1.xpose.msra.mxu0 0.0
        %889 = vmatprep.subr.mxu0 0.0
        %890 = vmatpush1.xpose.msra.mxu0 0.0
        %891 = vmatprep.subr.mxu0 0.0
        %892 = vmatpush1.xpose.msra.mxu0 0.0
        %893 = vmatprep.subr.mxu0 0.0
        %894 = vmatpush1.xpose.msra.mxu0 0.0
        %895 = vmatprep.subr.mxu0 0.0
        %896 = vmatpush1.xpose.msra.mxu0 0.0
        %897 = vmatprep.subr.mxu0 0.0
        %898 = vmatpush1.xpose.msra.mxu0 0.0
        %899 = vmatprep.subr.mxu0 0.0
        %900 = vmatpush1.xpose.msra.mxu0 0.0
        %901 = vmatprep.subr.mxu0 0.0
        %902 = vmatpush1.xpose.msra.mxu0 0.0
        %903 = vmatprep.subr.mxu0 0.0
        %904 = vmatpush1.xpose.msra.mxu0 0.0
        %905 = vmatprep.subr.mxu0 0.0
        %906 = vmatpush1.xpose.msra.mxu0 0.0
        %907 = vmatprep.subr.mxu0 0.0
        %908 = vmatpush1.xpose.msra.mxu0 0.0
        %909 = vmatprep.subr.mxu0 0.0
        %910 = vmatpush1.xpose.msra.mxu0 0.0
        %911 = vmatprep.subr.mxu0 0.0
        %912 = vmatpush1.xpose.msra.mxu0 0.0
        %913 = vmatprep.subr.mxu0 0.0
        %914 = vmatpush1.xpose.msra.mxu0 0.0
        %915 = vmatprep.subr.mxu0 0.0
        %916 = vmatpush1.xpose.msra.mxu0 0.0
        %917 = vmatprep.subr.mxu0 0.0
        %918 = vmatpush1.xpose.msra.mxu0 0.0
        %919 = vmatprep.subr.mxu0 0.0
        %920 = vmatpush1.xpose.msra.mxu0 0.0
        %921 = vmatprep.subr.mxu0 0.0
        %922 = vmatpush1.xpose.msra.mxu0 0.0
        %923 = vmatprep.subr.mxu0 0.0
        %924 = vmatpush1.xpose.msra.mxu0 0.0
        %925 = vmatprep.subr.mxu0 0.0
        %926 = vmatpush1.xpose.msra.mxu0 0.0
        %927 = vmatprep.subr.mxu0 0.0
        %928 = vmatpush1.xpose.msra.mxu0 0.0
        %929 = vmatprep.subr.mxu0 0.0
        %930 = vmatpush1.xpose.msra.mxu0 0.0
        %931 = vmatprep.subr.mxu0 0.0
        %932 = vmatpush1.xpose.msra.mxu0 0.0
        %933 = vmatprep.subr.mxu0 0.0
        %934 = vmatpush1.xpose.msra.mxu0 0.0
        %935 = vmatprep.subr.mxu0 0.0
        %936 = vmatpush1.xpose.msra.mxu0 0.0
        %937 = vmatprep.subr.mxu0 0.0
        %938 = vmatpush1.xpose.msra.mxu0 0.0
        %939 = vmatprep.subr.mxu0 0.0
        %940 = vmatpush1.xpose.msra.mxu0 0.0
        %941 = vmatprep.subr.mxu0 0.0
        %942 = vmatpush1.xpose.msra.mxu0 0.0
        %943 = vmatprep.subr.mxu0 0.0
        %944 = vmatpush1.xpose.msra.mxu0 0.0
        %945 = vmatprep.subr.mxu0 0.0
        %946 = vmatpush1.xpose.msra.mxu0 0.0
        %947 = vmatprep.mubr.f32.mxu0 0.0
        %948 = vmatmul.mubr.f32.gmra.mrb[0].mxu0 %v875
        %v949 = vpop.f32.mrb[0].mxu0
        %v950 = vadd.f32 %v667, %v949
        %v951 = vpop.f32.mrb[0].mxu0
        %952 = vmatprep.mubr.f32.mxu0 0.0
        %953 = vmatmul.mubr.f32.gmra.mrb[0].mxu0 %v877
        %v954 = vpop.f32.mrb[0].mxu0
        %v955 = vadd.f32 %v668, %v954
        %v956 = vpop.f32.mrb[0].mxu0
        %957 = vdwg.mxu0
        %v958 = vsel %vm757, %v950, -inf
        %959 = vmax.xlane.f32.xlu0 %v958
        %v960 = vpop.xlane.xlu0 %959
        %v961 = vsel %vm757, %v955, -inf
        %962 = vmax.xlane.f32.xlu0 %v961
        %v963 = vpop.xlane.xlu0 %962
        %v964 = vsub.f32 %v950, %v960
        %v965 = vsub.f32 %v955, %v963
        %v966 = vmul.f32 %v964, 1.442695
        %v967 = vpow.pop %v966
        %v968 = vmul.f32 %v965, 1.442695
        %v969 = vpow.pop %v968
        %v970 = vsel %vm757, %v967, 0.0
        %971 = vadd.xlane.f32.xlu0 %v970
        %v972 = vpop.xlane.xlu0 %971
        %v973 = vsel %vm757, %v969, 0.0
        %974 = vadd.xlane.f32.xlu0 %v973
        %v975 = vpop.xlane.xlu0 %974
        %978 = vrot.lane.b32.xlu0 %v659, 120
        %v979 = vpop.permute.xlu0 %978
        %980 = vrot.lane.b32.xlu0 %v664, 120
        %v981 = vpop.permute.xlu0 %980
        %v985 = vsel %vm757, %v967, 0
        %v988 = vsel %vm757, %v969, 0
        %990 = vmatprep.subr.mxu0 0.0
        %991 = vmatpush1.msra.mxu0 %v979
        %992 = vmatprep.subr.mxu0 0.0
        %993 = vmatpush1.msra.mxu0 %v981
        %994 = vmatprep.subr.mxu0 0.0
        %995 = vmatpush1.msra.mxu0 0.0
        %996 = vmatprep.subr.mxu0 0.0
        %997 = vmatpush1.msra.mxu0 0.0
        %998 = vmatprep.subr.mxu0 0.0
        %999 = vmatpush1.msra.mxu0 0.0
        %1000 = vmatprep.subr.mxu0 0.0
        %1001 = vmatpush1.msra.mxu0 0.0
        %1002 = vmatprep.subr.mxu0 0.0
        %1003 = vmatpush1.msra.mxu0 0.0
        %1004 = vmatprep.subr.mxu0 0.0
        %1005 = vmatpush1.msra.mxu0 0.0
        %1006 = vmatprep.subr.mxu0 0.0
        %1007 = vmatpush1.msra.mxu0 0.0
        %1008 = vmatprep.subr.mxu0 0.0
        %1009 = vmatpush1.msra.mxu0 0.0
        %1010 = vmatprep.subr.mxu0 0.0
        %1011 = vmatpush1.msra.mxu0 0.0
        %1012 = vmatprep.subr.mxu0 0.0
        %1013 = vmatpush1.msra.mxu0 0.0
        %1014 = vmatprep.subr.mxu0 0.0
        %1015 = vmatpush1.msra.mxu0 0.0
        %1016 = vmatprep.subr.mxu0 0.0
        %1017 = vmatpush1.msra.mxu0 0.0
        %1018 = vmatprep.subr.mxu0 0.0
        %1019 = vmatpush1.msra.mxu0 0.0
        %1020 = vmatprep.subr.mxu0 0.0
        %1021 = vmatpush1.msra.mxu0 0.0
        %1022 = vmatprep.subr.mxu0 0.0
        %1023 = vmatpush1.msra.mxu0 0.0
        %1024 = vmatprep.subr.mxu0 0.0
        %1025 = vmatpush1.msra.mxu0 0.0
        %1026 = vmatprep.subr.mxu0 0.0
        %1027 = vmatpush1.msra.mxu0 0.0
        %1028 = vmatprep.subr.mxu0 0.0
        %1029 = vmatpush1.msra.mxu0 0.0
        %1030 = vmatprep.subr.mxu0 0.0
        %1031 = vmatpush1.msra.mxu0 0.0
        %1032 = vmatprep.subr.mxu0 0.0
        %1033 = vmatpush1.msra.mxu0 0.0
        %1034 = vmatprep.subr.mxu0 0.0
        %1035 = vmatpush1.msra.mxu0 0.0
        %1036 = vmatprep.subr.mxu0 0.0
        %1037 = vmatpush1.msra.mxu0 0.0
        %1038 = vmatprep.subr.mxu0 0.0
        %1039 = vmatpush1.msra.mxu0 0.0
        %1040 = vmatprep.subr.mxu0 0.0
        %1041 = vmatpush1.msra.mxu0 0.0
        %1042 = vmatprep.subr.mxu0 0.0
        %1043 = vmatpush1.msra.mxu0 0.0
        %1044 = vmatprep.subr.mxu0 0.0
        %1045 = vmatpush1.msra.mxu0 0.0
        %1046 = vmatprep.subr.mxu0 0.0
        %1047 = vmatpush1.msra.mxu0 0.0
        %1048 = vmatprep.subr.mxu0 0.0
        %1049 = vmatpush1.msra.mxu0 0.0
        %1050 = vmatprep.subr.mxu0 0.0
        %1051 = vmatpush1.msra.mxu0 0.0
        %1052 = vmatprep.subr.mxu0 0.0
        %1053 = vmatpush1.msra.mxu0 0.0
        %1054 = vmatprep.mubr.f32.mxu0 0.0
        %1055 = vmatmul.mubr.f32.gmra.mrb[0].mxu0 %v985
        %v1056 = vpop.f32.mrb[0].mxu0
        %v1057 = vadd.f32 0.0, %v1056
        %v1058 = vpop.f32.mrb[0].mxu0
        %1059 = vmatprep.mubr.f32.mxu0 0.0
        %1060 = vmatmul.mubr.f32.gmra.mrb[0].mxu0 %v988
        %v1061 = vpop.f32.mrb[0].mxu0
        %v1062 = vadd.f32 0.0, %v1061
        %v1063 = vpop.f32.mrb[0].mxu0
        %1064 = vdwg.mxu0
        %v1065 = vrcp.pop %v972
        %v1066 = vrcp.pop %v975
        %v1067 = vmul.f32 %v972, %v1065
        %v1068 = vmul.f32 %v975, %v1066
        %v1069 = vsub.f32 2.0, %v1067
        %v1070 = vsub.f32 2.0, %v1068
        %v1071 = vmul.f32 %v1065, %v1069
        %v1072 = vmul.f32 %v1066, %v1070
        %v1073 = vmul.f32 %v1057, %v1071
        %v1074 = vmul.f32 %v1062, %v1072
        %1075 = vrot.lane.b32.xlu0 %v471, 112
        %v1076 = vpop.permute.xlu0 %1075
        %1077 = vrot.lane.b32.xlu0 %v476, 112
        %v1078 = vpop.permute.xlu0 %1077
        %1079 = vrot.lane.b32.xlu0 %v565, 112
        %v1080 = vpop.permute.xlu0 %1079
        %1081 = vrot.lane.b32.xlu0 %v570, 112
        %v1082 = vpop.permute.xlu0 %1081
        %v1083 = vsel %vm669, %v1076, 0
        %v1085 = vsel %vm669, %v1078, 0
        %v1087 = vsel %vm669, %v1080, 0
        %v1089 = vsel %vm669, %v1082, 0
        %1091 = vmatprep.subr.mxu0 0.0
        %1092 = vmatpush1.xpose.msra.mxu0 %v1087
        %1093 = vmatprep.subr.mxu0 0.0
        %1094 = vmatpush1.xpose.msra.mxu0 %v1089
        %1095 = vmatprep.subr.mxu0 0.0
        %1096 = vmatpush1.xpose.msra.mxu0 0.0
        %1097 = vmatprep.subr.mxu0 0.0
        %1098 = vmatpush1.xpose.msra.mxu0 0.0
        %1099 = vmatprep.subr.mxu0 0.0
        %1100 = vmatpush1.xpose.msra.mxu0 0.0
        %1101 = vmatprep.subr.mxu0 0.0
        %1102 = vmatpush1.xpose.msra.mxu0 0.0
        %1103 = vmatprep.subr.mxu0 0.0
        %1104 = vmatpush1.xpose.msra.mxu0 0.0
        %1105 = vmatprep.subr.mxu0 0.0
        %1106 = vmatpush1.xpose.msra.mxu0 0.0
        %1107 = vmatprep.subr.mxu0 0.0
        %1108 = vmatpush1.xpose.msra.mxu0 0.0
        %1109 = vmatprep.subr.mxu0 0.0
        %1110 = vmatpush1.xpose.msra.mxu0 0.0
        %1111 = vmatprep.subr.mxu0 0.0
        %1112 = vmatpush1.xpose.msra.mxu0 0.0
        %1113 = vmatprep.subr.mxu0 0.0
        %1114 = vmatpush1.xpose.msra.mxu0 0.0
        %1115 = vmatprep.subr.mxu0 0.0
        %1116 = vmatpush1.xpose.msra.mxu0 0.0
        %1117 = vmatprep.subr.mxu0 0.0
        %1118 = vmatpush1.xpose.msra.mxu0 0.0
        %1119 = vmatprep.subr.mxu0 0.0
        %1120 = vmatpush1.xpose.msra.mxu0 0.0
        %1121 = vmatprep.subr.mxu0 0.0
        %1122 = vmatpush1.xpose.msra.mxu0 0.0
        %1123 = vmatprep.subr.mxu0 0.0
        %1124 = vmatpush1.xpose.msra.mxu0 0.0
        %1125 = vmatprep.subr.mxu0 0.0
        %1126 = vmatpush1.xpose.msra.mxu0 0.0
        %1127 = vmatprep.subr.mxu0 0.0
        %1128 = vmatpush1.xpose.msra.mxu0 0.0
        %1129 = vmatprep.subr.mxu0 0.0
        %1130 = vmatpush1.xpose.msra.mxu0 0.0
        %1131 = vmatprep.subr.mxu0 0.0
        %1132 = vmatpush1.xpose.msra.mxu0 0.0
        %1133 = vmatprep.subr.mxu0 0.0
        %1134 = vmatpush1.xpose.msra.mxu0 0.0
        %1135 = vmatprep.subr.mxu0 0.0
        %1136 = vmatpush1.xpose.msra.mxu0 0.0
        %1137 = vmatprep.subr.mxu0 0.0
        %1138 = vmatpush1.xpose.msra.mxu0 0.0
        %1139 = vmatprep.subr.mxu0 0.0
        %1140 = vmatpush1.xpose.msra.mxu0 0.0
        %1141 = vmatprep.subr.mxu0 0.0
        %1142 = vmatpush1.xpose.msra.mxu0 0.0
        %1143 = vmatprep.subr.mxu0 0.0
        %1144 = vmatpush1.xpose.msra.mxu0 0.0
        %1145 = vmatprep.subr.mxu0 0.0
        %1146 = vmatpush1.xpose.msra.mxu0 0.0
        %1147 = vmatprep.subr.mxu0 0.0
        %1148 = vmatpush1.xpose.msra.mxu0 0.0
        %1149 = vmatprep.subr.mxu0 0.0
        %1150 = vmatpush1.xpose.msra.mxu0 0.0
        %1151 = vmatprep.subr.mxu0 0.0
        %1152 = vmatpush1.xpose.msra.mxu0 0.0
        %1153 = vmatprep.subr.mxu0 0.0
        %1154 = vmatpush1.xpose.msra.mxu0 0.0
        %1155 = vmatprep.mubr.f32.mxu0 0.0
        %1156 = vmatmul.mubr.f32.gmra.mrb[0].mxu0 %v1083
        %v1157 = vpop.f32.mrb[0].mxu0
        %v1158 = vadd.f32 %v667, %v1157
        %v1159 = vpop.f32.mrb[0].mxu0
        %1160 = vmatprep.mubr.f32.mxu0 0.0
        %1161 = vmatmul.mubr.f32.gmra.mrb[0].mxu0 %v1085
        %v1162 = vpop.f32.mrb[0].mxu0
        %v1163 = vadd.f32 %v668, %v1162
        %v1164 = vpop.f32.mrb[0].mxu0
        %1165 = vdwg.mxu0
        %v1166 = vsel %vm757, %v1158, -inf
        %1167 = vmax.xlane.f32.xlu0 %v1166
        %v1168 = vpop.xlane.xlu0 %1167
        %v1169 = vsel %vm757, %v1163, -inf
        %1170 = vmax.xlane.f32.xlu0 %v1169
        %v1171 = vpop.xlane.xlu0 %1170
        %v1172 = vsub.f32 %v1158, %v1168
        %v1173 = vsub.f32 %v1163, %v1171
        %v1174 = vmul.f32 %v1172, 1.442695
        %v1175 = vpow.pop %v1174
        %v1176 = vmul.f32 %v1173, 1.442695
        %v1177 = vpow.pop %v1176
        %v1178 = vsel %vm757, %v1175, 0.0
        %1179 = vadd.xlane.f32.xlu0 %v1178
        %v1180 = vpop.xlane.xlu0 %1179
        %v1181 = vsel %vm757, %v1177, 0.0
        %1182 = vadd.xlane.f32.xlu0 %v1181
        %v1183 = vpop.xlane.xlu0 %1182
        %1184 = vrot.lane.b32.xlu0 %v659, 112
        %v1185 = vpop.permute.xlu0 %1184
        %1186 = vrot.lane.b32.xlu0 %v664, 112
        %v1187 = vpop.permute.xlu0 %1186
        %v1191 = vsel %vm757, %v1175, 0
        %v1194 = vsel %vm757, %v1177, 0
        %1196 = vmatprep.subr.mxu0 0.0
        %1197 = vmatpush1.msra.mxu0 %v1185
        %1198 = vmatprep.subr.mxu0 0.0
        %1199 = vmatpush1.msra.mxu0 %v1187
        %1200 = vmatprep.subr.mxu0 0.0
        %1201 = vmatpush1.msra.mxu0 0.0
        %1202 = vmatprep.subr.mxu0 0.0
        %1203 = vmatpush1.msra.mxu0 0.0
        %1204 = vmatprep.subr.mxu0 0.0
        %1205 = vmatpush1.msra.mxu0 0.0
        %1206 = vmatprep.subr.mxu0 0.0
        %1207 = vmatpush1.msra.mxu0 0.0
        %1208 = vmatprep.subr.mxu0 0.0
        %1209 = vmatpush1.msra.mxu0 0.0
        %1210 = vmatprep.subr.mxu0 0.0
        %1211 = vmatpush1.msra.mxu0 0.0
        %1212 = vmatprep.subr.mxu0 0.0
        %1213 = vmatpush1.msra.mxu0 0.0
        %1214 = vmatprep.subr.mxu0 0.0
        %1215 = vmatpush1.msra.mxu0 0.0
        %1216 = vmatprep.subr.mxu0 0.0
        %1217 = vmatpush1.msra.mxu0 0.0
        %1218 = vmatprep.subr.mxu0 0.0
        %1219 = vmatpush1.msra.mxu0 0.0
        %1220 = vmatprep.subr.mxu0 0.0
        %1221 = vmatpush1.msra.mxu0 0.0
        %1222 = vmatprep.subr.mxu0 0.0
        %1223 = vmatpush1.msra.mxu0 0.0
        %1224 = vmatprep.subr.mxu0 0.0
        %1225 = vmatpush1.msra.mxu0 0.0
        %1226 = vmatprep.subr.mxu0 0.0
        %1227 = vmatpush1.msra.mxu0 0.0
        %1228 = vmatprep.subr.mxu0 0.0
        %1229 = vmatpush1.msra.mxu0 0.0
        %1230 = vmatprep.subr.mxu0 0.0
        %1231 = vmatpush1.msra.mxu0 0.0
        %1232 = vmatprep.subr.mxu0 0.0
        %1233 = vmatpush1.msra.mxu0 0.0
        %1234 = vmatprep.subr.mxu0 0.0
        %1235 = vmatpush1.msra.mxu0 0.0
        %1236 = vmatprep.subr.mxu0 0.0
        %1237 = vmatpush1.msra.mxu0 0.0
        %1238 = vmatprep.subr.mxu0 0.0
        %1239 = vmatpush1.msra.mxu0 0.0
        %1240 = vmatprep.subr.mxu0 0.0
        %1241 = vmatpush1.msra.mxu0 0.0
        %1242 = vmatprep.subr.mxu0 0.0
        %1243 = vmatpush1.msra.mxu0 0.0
        %1244 = vmatprep.subr.mxu0 0.0
        %1245 = vmatpush1.msra.mxu0 0.0
        %1246 = vmatprep.subr.mxu0 0.0
        %1247 = vmatpush1.msra.mxu0 0.0
        %1248 = vmatprep.subr.mxu0 0.0
        %1249 = vmatpush1.msra.mxu0 0.0
        %1250 = vmatprep.subr.mxu0 0.0
        %1251 = vmatpush1.msra.mxu0 0.0
        %1252 = vmatprep.subr.mxu0 0.0
        %1253 = vmatpush1.msra.mxu0 0.0
        %1254 = vmatprep.subr.mxu0 0.0
        %1255 = vmatpush1.msra.mxu0 0.0
        %1256 = vmatprep.subr.mxu0 0.0
        %1257 = vmatpush1.msra.mxu0 0.0
        %1258 = vmatprep.subr.mxu0 0.0
        %1259 = vmatpush1.msra.mxu0 0.0
        %1260 = vmatprep.mubr.f32.mxu0 0.0
        %1261 = vmatmul.mubr.f32.gmra.mrb[0].mxu0 %v1191
        %v1262 = vpop.f32.mrb[0].mxu0
        %v1263 = vadd.f32 0.0, %v1262
        %v1264 = vpop.f32.mrb[0].mxu0
        %1265 = vmatprep.mubr.f32.mxu0 0.0
        %1266 = vmatmul.mubr.f32.gmra.mrb[0].mxu0 %v1194
        %v1267 = vpop.f32.mrb[0].mxu0
        %v1268 = vadd.f32 0.0, %v1267
        %v1269 = vpop.f32.mrb[0].mxu0
        %1270 = vdwg.mxu0
        %v1271 = vrcp.pop %v1180
        %v1272 = vrcp.pop %v1183
        %v1273 = vmul.f32 %v1180, %v1271
        %v1274 = vmul.f32 %v1183, %v1272
        %v1275 = vsub.f32 2.0, %v1273
        %v1276 = vsub.f32 2.0, %v1274
        %v1277 = vmul.f32 %v1271, %v1275
        %v1278 = vmul.f32 %v1272, %v1276
        %v1279 = vmul.f32 %v1263, %v1277
        %v1280 = vmul.f32 %v1268, %v1278
        %1281 = vrot.lane.b32.xlu0 %v471, 104
        %v1282 = vpop.permute.xlu0 %1281
        %1283 = vrot.lane.b32.xlu0 %v476, 104
        %v1284 = vpop.permute.xlu0 %1283
        %1285 = vrot.lane.b32.xlu0 %v565, 104
        %v1286 = vpop.permute.xlu0 %1285
        %1287 = vrot.lane.b32.xlu0 %v570, 104
        %v1288 = vpop.permute.xlu0 %1287
        %v1289 = vsel %vm669, %v1282, 0
        %v1291 = vsel %vm669, %v1284, 0
        %v1293 = vsel %vm669, %v1286, 0
        %v1295 = vsel %vm669, %v1288, 0
        %1297 = vmatprep.subr.mxu0 0.0
        %1298 = vmatpush1.xpose.msra.mxu0 %v1293
        %1299 = vmatprep.subr.mxu0 0.0
        %1300 = vmatpush1.xpose.msra.mxu0 %v1295
        %1301 = vmatprep.subr.mxu0 0.0
        %1302 = vmatpush1.xpose.msra.mxu0 0.0
        %1303 = vmatprep.subr.mxu0 0.0
        %1304 = vmatpush1.xpose.msra.mxu0 0.0
        %1305 = vmatprep.subr.mxu0 0.0
        %1306 = vmatpush1.xpose.msra.mxu0 0.0
        %1307 = vmatprep.subr.mxu0 0.0
        %1308 = vmatpush1.xpose.msra.mxu0 0.0
        %1309 = vmatprep.subr.mxu0 0.0
        %1310 = vmatpush1.xpose.msra.mxu0 0.0
        %1311 = vmatprep.subr.mxu0 0.0
        %1312 = vmatpush1.xpose.msra.mxu0 0.0
        %1313 = vmatprep.subr.mxu0 0.0
        %1314 = vmatpush1.xpose.msra.mxu0 0.0
        %1315 = vmatprep.subr.mxu0 0.0
        %1316 = vmatpush1.xpose.msra.mxu0 0.0
        %1317 = vmatprep.subr.mxu0 0.0
        %1318 = vmatpush1.xpose.msra.mxu0 0.0
        %1319 = vmatprep.subr.mxu0 0.0
        %1320 = vmatpush1.xpose.msra.mxu0 0.0
        %1321 = vmatprep.subr.mxu0 0.0
        %1322 = vmatpush1.xpose.msra.mxu0 0.0
        %1323 = vmatprep.subr.mxu0 0.0
        %1324 = vmatpush1.xpose.msra.mxu0 0.0
        %1325 = vmatprep.subr.mxu0 0.0
        %1326 = vmatpush1.xpose.msra.mxu0 0.0
        %1327 = vmatprep.subr.mxu0 0.0
        %1328 = vmatpush1.xpose.msra.mxu0 0.0
        %1329 = vmatprep.subr.mxu0 0.0
        %1330 = vmatpush1.xpose.msra.mxu0 0.0
        %1331 = vmatprep.subr.mxu0 0.0
        %1332 = vmatpush1.xpose.msra.mxu0 0.0
        %1333 = vmatprep.subr.mxu0 0.0
        %1334 = vmatpush1.xpose.msra.mxu0 0.0
        %1335 = vmatprep.subr.mxu0 0.0
        %1336 = vmatpush1.xpose.msra.mxu0 0.0
        %1337 = vmatprep.subr.mxu0 0.0
        %1338 = vmatpush1.xpose.msra.mxu0 0.0
        %1339 = vmatprep.subr.mxu0 0.0
        %1340 = vmatpush1.xpose.msra.mxu0 0.0
        %1341 = vmatprep.subr.mxu0 0.0
        %1342 = vmatpush1.xpose.msra.mxu0 0.0
        %1343 = vmatprep.subr.mxu0 0.0
        %1344 = vmatpush1.xpose.msra.mxu0 0.0
        %1345 = vmatprep.subr.mxu0 0.0
        %1346 = vmatpush1.xpose.msra.mxu0 0.0
        %1347 = vmatprep.subr.mxu0 0.0
        %1348 = vmatpush1.xpose.msra.mxu0 0.0
        %1349 = vmatprep.subr.mxu0 0.0
        %1350 = vmatpush1.xpose.msra.mxu0 0.0
        %1351 = vmatprep.subr.mxu0 0.0
        %1352 = vmatpush1.xpose.msra.mxu0 0.0
        %1353 = vmatprep.subr.mxu0 0.0
        %1354 = vmatpush1.xpose.msra.mxu0 0.0
        %1355 = vmatprep.subr.mxu0 0.0
        %1356 = vmatpush1.xpose.msra.mxu0 0.0
        %1357 = vmatprep.subr.mxu0 0.0
        %1358 = vmatpush1.xpose.msra.mxu0 0.0
        %1359 = vmatprep.subr.mxu0 0.0
        %1360 = vmatpush1.xpose.msra.mxu0 0.0
        %1361 = vmatprep.mubr.f32.mxu0 0.0
        %1362 = vmatmul.mubr.f32.gmra.mrb[0].mxu0 %v1289
        %v1363 = vpop.f32.mrb[0].mxu0
        %v1364 = vadd.f32 %v667, %v1363
        %v1365 = vpop.f32.mrb[0].mxu0
        %1366 = vmatprep.mubr.f32.mxu0 0.0
        %1367 = vmatmul.mubr.f32.gmra.mrb[0].mxu0 %v1291
        %v1368 = vpop.f32.mrb[0].mxu0
        %v1369 = vadd.f32 %v668, %v1368
        %v1370 = vpop.f32.mrb[0].mxu0
        %1371 = vdwg.mxu0
        %v1372 = vsel %vm757, %v1364, -inf
        %1373 = vmax.xlane.f32.xlu0 %v1372
        %v1374 = vpop.xlane.xlu0 %1373
        %v1375 = vsel %vm757, %v1369, -inf
        %1376 = vmax.xlane.f32.xlu0 %v1375
        %v1377 = vpop.xlane.xlu0 %1376
        %v1378 = vsub.f32 %v1364, %v1374
        %v1379 = vsub.f32 %v1369, %v1377
        %v1380 = vmul.f32 %v1378, 1.442695
        %v1381 = vpow.pop %v1380
        %v1382 = vmul.f32 %v1379, 1.442695
        %v1383 = vpow.pop %v1382
        %v1384 = vsel %vm757, %v1381, 0.0
        %1385 = vadd.xlane.f32.xlu0 %v1384
        %v1386 = vpop.xlane.xlu0 %1385
        %v1387 = vsel %vm757, %v1383, 0.0
        %1388 = vadd.xlane.f32.xlu0 %v1387
        %v1389 = vpop.xlane.xlu0 %1388
        %1390 = vrot.lane.b32.xlu0 %v659, 104
        %v1391 = vpop.permute.xlu0 %1390
        %1392 = vrot.lane.b32.xlu0 %v664, 104
        %v1393 = vpop.permute.xlu0 %1392
        %v1397 = vsel %vm757, %v1381, 0
        %v1400 = vsel %vm757, %v1383, 0
        %1402 = vmatprep.subr.mxu0 0.0
        %1403 = vmatpush1.msra.mxu0 %v1391
        %1404 = vmatprep.subr.mxu0 0.0
        %1405 = vmatpush1.msra.mxu0 %v1393
        %1406 = vmatprep.subr.mxu0 0.0
        %1407 = vmatpush1.msra.mxu0 0.0
        %1408 = vmatprep.subr.mxu0 0.0
        %1409 = vmatpush1.msra.mxu0 0.0
        %1410 = vmatprep.subr.mxu0 0.0
        %1411 = vmatpush1.msra.mxu0 0.0
        %1412 = vmatprep.subr.mxu0 0.0
        %1413 = vmatpush1.msra.mxu0 0.0
        %1414 = vmatprep.subr.mxu0 0.0
        %1415 = vmatpush1.msra.mxu0 0.0
        %1416 = vmatprep.subr.mxu0 0.0
        %1417 = vmatpush1.msra.mxu0 0.0
        %1418 = vmatprep.subr.mxu0 0.0
        %1419 = vmatpush1.msra.mxu0 0.0
        %1420 = vmatprep.subr.mxu0 0.0
        %1421 = vmatpush1.msra.mxu0 0.0
        %1422 = vmatprep.subr.mxu0 0.0
        %1423 = vmatpush1.msra.mxu0 0.0
        %1424 = vmatprep.subr.mxu0 0.0
        %1425 = vmatpush1.msra.mxu0 0.0
        %1426 = vmatprep.subr.mxu0 0.0
        %1427 = vmatpush1.msra.mxu0 0.0
        %1428 = vmatprep.subr.mxu0 0.0
        %1429 = vmatpush1.msra.mxu0 0.0
        %1430 = vmatprep.subr.mxu0 0.0
        %1431 = vmatpush1.msra.mxu0 0.0
        %1432 = vmatprep.subr.mxu0 0.0
        %1433 = vmatpush1.msra.mxu0 0.0
        %1434 = vmatprep.subr.mxu0 0.0
        %1435 = vmatpush1.msra.mxu0 0.0
        %1436 = vmatprep.subr.mxu0 0.0
        %1437 = vmatpush1.msra.mxu0 0.0
        %1438 = vmatprep.subr.mxu0 0.0
        %1439 = vmatpush1.msra.mxu0 0.0
        %1440 = vmatprep.subr.mxu0 0.0
        %1441 = vmatpush1.msra.mxu0 0.0
        %1442 = vmatprep.subr.mxu0 0.0
        %1443 = vmatpush1.msra.mxu0 0.0
        %1444 = vmatprep.subr.mxu0 0.0
        %1445 = vmatpush1.msra.mxu0 0.0
        %1446 = vmatprep.subr.mxu0 0.0
        %1447 = vmatpush1.msra.mxu0 0.0
        %1448 = vmatprep.subr.mxu0 0.0
        %1449 = vmatpush1.msra.mxu0 0.0
        %1450 = vmatprep.subr.mxu0 0.0
        %1451 = vmatpush1.msra.mxu0 0.0
        %1452 = vmatprep.subr.mxu0 0.0
        %1453 = vmatpush1.msra.mxu0 0.0
        %1454 = vmatprep.subr.mxu0 0.0
        %1455 = vmatpush1.msra.mxu0 0.0
        %1456 = vmatprep.subr.mxu0 0.0
        %1457 = vmatpush1.msra.mxu0 0.0
        %1458 = vmatprep.subr.mxu0 0.0
        %1459 = vmatpush1.msra.mxu0 0.0
        %1460 = vmatprep.subr.mxu0 0.0
        %1461 = vmatpush1.msra.mxu0 0.0
        %1462 = vmatprep.subr.mxu0 0.0
        %1463 = vmatpush1.msra.mxu0 0.0
        %1464 = vmatprep.subr.mxu0 0.0
        %1465 = vmatpush1.msra.mxu0 0.0
        %1466 = vmatprep.mubr.f32.mxu0 0.0
        %1467 = vmatmul.mubr.f32.gmra.mrb[0].mxu0 %v1397
        %v1468 = vpop.f32.mrb[0].mxu0
        %v1469 = vadd.f32 0.0, %v1468
        %v1470 = vpop.f32.mrb[0].mxu0
        %1471 = vmatprep.mubr.f32.mxu0 0.0
        %1472 = vmatmul.mubr.f32.gmra.mrb[0].mxu0 %v1400
        %v1473 = vpop.f32.mrb[0].mxu0
        %v1474 = vadd.f32 0.0, %v1473
        %v1475 = vpop.f32.mrb[0].mxu0
        %1476 = vdwg.mxu0
        %v1477 = vrcp.pop %v1386
        %v1478 = vrcp.pop %v1389
        %v1479 = vmul.f32 %v1386, %v1477
        %v1480 = vmul.f32 %v1389, %v1478
        %v1481 = vsub.f32 2.0, %v1479
        %v1482 = vsub.f32 2.0, %v1480
        %v1483 = vmul.f32 %v1477, %v1481
        %v1484 = vmul.f32 %v1478, %v1482
        %v1485 = vmul.f32 %v1469, %v1483
        %v1486 = vmul.f32 %v1474, %v1484
        %1489 = vrot.lane.b32.xlu0 %v1073, 8
        %v1490 = vpop.permute.xlu0 %1489
        %1491 = vrot.lane.b32.xlu0 %v1074, 8
        %v1492 = vpop.permute.xlu0 %1491
        %1497 = vrot.lane.b32.xlu0 %v1279, 16
        %v1498 = vpop.permute.xlu0 %1497
        %1499 = vrot.lane.b32.xlu0 %v1280, 16
        %v1500 = vpop.permute.xlu0 %1499
        %1505 = vrot.lane.b32.xlu0 %v1485, 24
        %v1506 = vpop.permute.xlu0 %1505
        %1507 = vrot.lane.b32.xlu0 %v1486, 24
        %v1508 = vpop.permute.xlu0 %1507
        %v1511 = vsel %vm669, %v865, %v1490
        %v1512 = vsel %vm669, %v866, %v1492
        %v1513 = vsel %vm757, %v1511, %v1498
        %v1514 = vsel %vm757, %v1512, %v1500
        %vm1515 = vcmask 195584
        %v1516 = vsel %vm1515, %v1513, %v1506
        %v1517 = vsel %vm1515, %v1514, %v1508
        %s1518 = scalar_lea.vmem [#allocation8], 96
        %v1519 = vld [vmem:[%s1518] sm:$0xff]
        %v1520 = vld [vmem:[%s1518 + $0x8] sm:$0xff]
        %v1521 = vld [vmem:[%s1518 + $0x10] sm:$0xff]
        %v1522 = vld [vmem:[%s1518 + $0x18] sm:$0xff]
        %s1523 = scalar_lea.vmem [#allocation10], 3
        %v1524 = vld [vmem:[%s1523] sm:$0x1]
        %v1526 = vlaneseq
        %v1527 = vshrl.u32 %v1526, 7
        %v1528 = vsub.s32 0, %v1527
        %v1529 = vrot.slane %v1524, %v1528
        %v1532 = vsel %vm397, %v1516, 0
        %v1535 = vsel %vm397, %v1517, 0
        %1537 = vmatprep.subr.mxu0 0.0
        %1538 = vmatpush1.msra.mxu0 %v1519
        %1539 = vmatprep.subr.mxu0 0.0
        %1540 = vmatpush1.msra.mxu0 %v1520
        %1541 = vmatprep.subr.mxu0 0.0
        %1542 = vmatpush1.msra.mxu0 %v1521
        %1543 = vmatprep.subr.mxu0 0.0
        %1544 = vmatpush1.msra.mxu0 %v1522
        %1545 = vmatprep.subr.mxu0 0.0
        %1546 = vmatpush1.msra.mxu0 0.0
        %1547 = vmatprep.subr.mxu0 0.0
        %1548 = vmatpush1.msra.mxu0 0.0
        %1549 = vmatprep.subr.mxu0 0.0
        %1550 = vmatpush1.msra.mxu0 0.0
        %1551 = vmatprep.subr.mxu0 0.0
        %1552 = vmatpush1.msra.mxu0 0.0
        %1553 = vmatprep.subr.mxu0 0.0
        %1554 = vmatpush1.msra.mxu0 0.0
        %1555 = vmatprep.subr.mxu0 0.0
        %1556 = vmatpush1.msra.mxu0 0.0
        %1557 = vmatprep.subr.mxu0 0.0
        %1558 = vmatpush1.msra.mxu0 0.0
        %1559 = vmatprep.subr.mxu0 0.0
        %1560 = vmatpush1.msra.mxu0 0.0
        %1561 = vmatprep.subr.mxu0 0.0
        %1562 = vmatpush1.msra.mxu0 0.0
        %1563 = vmatprep.subr.mxu0 0.0
        %1564 = vmatpush1.msra.mxu0 0.0
        %1565 = vmatprep.subr.mxu0 0.0
        %1566 = vmatpush1.msra.mxu0 0.0
        %1567 = vmatprep.subr.mxu0 0.0
        %1568 = vmatpush1.msra.mxu0 0.0
        %1569 = vmatprep.subr.mxu0 0.0
        %1570 = vmatpush1.msra.mxu0 0.0
        %1571 = vmatprep.subr.mxu0 0.0
        %1572 = vmatpush1.msra.mxu0 0.0
        %1573 = vmatprep.subr.mxu0 0.0
        %1574 = vmatpush1.msra.mxu0 0.0
        %1575 = vmatprep.subr.mxu0 0.0
        %1576 = vmatpush1.msra.mxu0 0.0
        %1577 = vmatprep.subr.mxu0 0.0
        %1578 = vmatpush1.msra.mxu0 0.0
        %1579 = vmatprep.subr.mxu0 0.0
        %1580 = vmatpush1.msra.mxu0 0.0
        %1581 = vmatprep.subr.mxu0 0.0
        %1582 = vmatpush1.msra.mxu0 0.0
        %1583 = vmatprep.subr.mxu0 0.0
        %1584 = vmatpush1.msra.mxu0 0.0
        %1585 = vmatprep.subr.mxu0 0.0
        %1586 = vmatpush1.msra.mxu0 0.0
        %1587 = vmatprep.subr.mxu0 0.0
        %1588 = vmatpush1.msra.mxu0 0.0
        %1589 = vmatprep.subr.mxu0 0.0
        %1590 = vmatpush1.msra.mxu0 0.0
        %1591 = vmatprep.subr.mxu0 0.0
        %1592 = vmatpush1.msra.mxu0 0.0
        %1593 = vmatprep.subr.mxu0 0.0
        %1594 = vmatpush1.msra.mxu0 0.0
        %1595 = vmatprep.subr.mxu0 0.0
        %1596 = vmatpush1.msra.mxu0 0.0
        %1597 = vmatprep.subr.mxu0 0.0
        %1598 = vmatpush1.msra.mxu0 0.0
        %1599 = vmatprep.subr.mxu0 0.0
        %1600 = vmatpush1.msra.mxu0 0.0
        %1601 = vmatprep.mubr.f32.mxu0 0.0
        %1602 = vmatmul.mubr.f32.gmra.mrb[0].mxu0 %v1532
        %v1603 = vpop.f32.mrb[0].mxu0
        %v1604 = vadd.f32 %v1529, %v1603
        %v1605 = vpop.f32.mrb[0].mxu0
        %1606 = vmatprep.mubr.f32.mxu0 0.0
        %1607 = vmatmul.mubr.f32.gmra.mrb[0].mxu0 %v1535
        %v1608 = vpop.f32.mrb[0].mxu0
        %v1609 = vadd.f32 %v1529, %v1608
        %v1610 = vpop.f32.mrb[0].mxu0
        %1611 = vdwg.mxu0
        %1612 = vst.msk [vmem:[%s375] sm:$0xff] %vm397, %v1604
        %1613 = vst.msk [vmem:[%s375 + $0x8] sm:$0xff] %vm397, %v1609
        %s1614 = sand.u32 %s176, 1
        %s1615 = scalar_lea.sflag [#allocation4], %s1614
        %s1616 = sand.u32 %s176, 1
        %s1617 = smul.addr %s1616, 16
        %s1618 = scalar_lea.vmem [#allocation11], %s1617
        // Predicated region
        $region65: #{tpu_custom_call.1} parent=43 // pred_check
          %p1619 = pneg %p186
        $region66: #{tpu_custom_call.1} parent=43 // pred_check_branch
          %1621 = sbr.rel (%p1619) target = $region68
        $region67: #{tpu_custom_call.1} parent=43 // pred_region
          %s1622 = smul.u32 2, %s27
          %s1624 = ssub.s32 256, 256
          %1625 = vsyncadd %s1615, %s1624
          %s1626 = smul.addr %s1622, 128
          %s1627 = scalar_lea.hbm %s6, %s1626
          %s1628 = sshll.u32 %s1618, 4
          %s1629 = int_to_ptr.vmem [resolvable:$true] %s1628
          %1634 = dma.vmem_to_hbm [thread:$0]  %s1629, 256, %s1627, %s1615, 128, 128, 8
        $region68: #{tpu_custom_call.1} parent=43 // pred_fallthru
          _
      $region44: #{tpu_custom_call.1} parent=5 // pred_fallthru
        _
      %p1635 = scmp.le.s32.totalorder 2, %s22
      // Predicated region
      $region69: #{tpu_custom_call.1} parent=5 // pred_check
        %p1636 = pneg %p1635
      $region70: #{tpu_custom_call.1} parent=5 // pred_check_branch
        %1638 = sbr.rel (%p1636) target = $region72
      $region71: #{tpu_custom_call.1} parent=5 // pred_region
        %s1639 = ssub.s32 %s22, 2
        // Predicated region
        $region73: #{tpu_custom_call.1} parent=71 // pred_check
          %p1640 = pneg %p192
        $region74: #{tpu_custom_call.1} parent=71 // pred_check_branch
          %1642 = sbr.rel (%p1640) target = $region76
        $region75: #{tpu_custom_call.1} parent=71 // pred_region
          %s1643 = sand.u32 %s177, 1
          %s1644 = scalar_lea.sflag [#allocation4], %s1643
          %s1645 = sand.u32 %s177, 1
          %s1646 = smul.addr %s1645, 16
          %s1647 = scalar_lea.vmem [#allocation11], %s1646
          %1648 = dma.done %s1644, 256
        $region76: #{tpu_custom_call.1} parent=71 // pred_fallthru
          _
      $region72: #{tpu_custom_call.1} parent=5 // pred_fallthru
        _
    $region6: #{tpu_custom_call.1} parent=1 // loop_footer
      %s26 = sadd.s32 1, %s22
    $region7: #{tpu_custom_call.1} parent=1 // loop_footer_branch
      %21 = sbr.rel target = $region3
    $region8: #{tpu_custom_call.1} parent=1 // loop_exit
      _
    %1649 = vsyncpa [#allocation3], 1
    %s1650 = scalar_lea.sflag [#allocation3], 1
    %1651 = vsyncpa %s1650, 1
    %1652 = vsyncpa [#allocation6], 1
    %s1653 = scalar_lea.sflag [#allocation6], 1
    %1654 = vsyncpa %s1653, 1
    %1655 = vsyncpa [#allocation9], 1
    %1656 = vsyncpa [#allocation4], 1
    %s1657 = scalar_lea.sflag [#allocation4], 1
    %1658 = vsyncpa %s1657, 1

</llo_original>
